<compile_context>
chip_gen: v7x
topology: tpu7x:2x2x1
jax: 0.10.0
libtpu: 0.0.40
codegen_flags: <defaults>
</compile_context>

<pallas_src>
import jax
import jax.numpy as jnp
from jax.experimental import pallas as pl
from jax.experimental.pallas import tpu as pltpu


def _make_fused_kernel(H, compute_dtype, precision):
    """Build the fused 3-layer conv kernel (closes over static H / dtypes)."""

    def kernel(x_ref, w1_ref, b1_ref, w2_ref, b2_ref, w3_ref, b3_ref, o_ref):
        m = x_ref.shape[0]                      # n_blk * H rows in this block

        # Per-image boundary masks implementing the H-direction zero padding.
        # Computed once per grid step, broadcast across lanes.
        row = jax.lax.broadcasted_iota(jnp.int32, (m, 1), 0)
        yy = row % H
        has_up = yy != 0                        # row y-1 is inside the same image
        has_down = yy != (H - 1)                # row y+1 is inside the same image

        def conv3x3(act, w_ref, b_ref, relu):
            # act: (m, K) float32.
            # out[y] = act[y-1]@B0 + act[y]@B1 + act[y+1]@B2 (+bias),
            # with out-of-image neighbours zeroed.  roll() runs on the XLU,
            # so no extra load/store slot pressure.
            up = jnp.where(has_up, pltpu.roll(act, shift=1, axis=0), 0.0)
            dn = jnp.where(has_down, pltpu.roll(act, shift=m - 1, axis=0), 0.0)
            acc = jnp.dot(up.astype(compute_dtype), w_ref[0],
                          preferred_element_type=jnp.float32,
                          precision=precision)
            acc = acc + jnp.dot(act.astype(compute_dtype), w_ref[1],
                                preferred_element_type=jnp.float32,
                                precision=precision)
            acc = acc + jnp.dot(dn.astype(compute_dtype), w_ref[2],
                                preferred_element_type=jnp.float32,
                                precision=precision)
            acc = acc + b_ref[...]              # bias stays f32 on the accumulator
            if relu:
                acc = jnp.maximum(acc, 0.0)
            return acc

        act = x_ref[...].astype(jnp.float32)
        act = conv3x3(act, w1_ref, b1_ref, relu=True)
        act = conv3x3(act, w2_ref, b2_ref, relu=True)
        act = conv3x3(act, w3_ref, b3_ref, relu=False)
        o_ref[...] = act.astype(o_ref.dtype)

    return kernel


def _banded_conv_weights(w_hwio, W):
    """(3,3,Cin,Cout) HWIO weights -> (3, W*Cin, W*Cout) banded matrices.

    B[ky][(x+kx-1)*Cin + ci, x*Cout + co] = w[ky, kx, ci, co]
    Out-of-range x+kx-1 blocks are dropped, which implements the width
    zero-padding of the conv directly in the matmul.
    """
    Cin, Cout = w_hwio.shape[2], w_hwio.shape[3]
    mats = []
    for ky in range(3):
        m = jnp.zeros((W * Cin, W * Cout), w_hwio.dtype)
        for kx in range(3):
            shift = jnp.eye(W, k=1 - kx, dtype=w_hwio.dtype)  # G[x+kx-1, x] = 1
            m = m + jnp.kron(shift, w_hwio[ky, kx])
        mats.append(m)
    return jnp.stack(mats, axis=0)


def _images_per_step(N, H, *, target_rows=128, min_steps=2):
    """Images per grid step: fill the MXU M dimension (n_blk*H >= target_rows)
    but keep >= min_steps grid steps so v7x's two TensorCores both get work."""
    desired = max(1, -(-target_rows // H))               # ceil(target/H)
    cap = max(1, N // min_steps) if N >= min_steps else max(1, N)
    limit = max(1, min(desired, cap))
    n_blk = 1
    for d in range(1, N + 1):
        if N % d == 0 and d <= limit:
            n_blk = d
    return n_blk


def extract_context_forward(x, params, *, data_format="NCHW",
                            compute_dtype=jnp.bfloat16):
    """Forward pass matching the PyTorch module.

    x: (N, Cin, H, W) for "NCHW" (PyTorch layout) or (N, H, W, Cin) for "NHWC".
    Pass data_format="NHWC" to skip the NCHW<->NHWC transposes around the
    kernel when the caller already holds channels-last data.
    """
    if data_format == "NCHW":
        x_nhwc = jnp.transpose(x, (0, 2, 3, 1))
    elif data_format == "NHWC":
        x_nhwc = x
    else:
        raise ValueError(f"unknown data_format {data_format!r}")

    N, H, W, Cin = x_nhwc.shape
    (w1, b1), (w2, b2), (w3, b3) = params                # HWIO weights
    Cout = w1.shape[-1]

    # Lane-dense (rows, W*C) layout; contiguous reshape, no data movement.
    x_ld = x_nhwc.reshape(N * H, W * Cin).astype(compute_dtype)

    # Banded im2col weights (width padding folded in).  NOTE: this does ~W/3x
    # the MACs of a direct 3x3 conv (zero blocks are multiplied) - fine while
    # W*C is small and the kernel is M/overhead-bound.
    # TODO(synk): switch to a K-tiled block-banded scheme (or per-kx lane
    # rolls) once W grows past ~64 and the MXU becomes the bottleneck.
    B1 = _banded_conv_weights(w1, W).astype(compute_dtype)   # (3, W*Cin,  W*Cout)
    B2 = _banded_conv_weights(w2, W).astype(compute_dtype)   # (3, W*Cout, W*Cout)
    B3 = _banded_conv_weights(w3, W).astype(compute_dtype)
    bt1 = jnp.tile(b1, W).reshape(1, W * Cout).astype(jnp.float32)
    bt2 = jnp.tile(b2, W).reshape(1, W * Cout).astype(jnp.float32)
    bt3 = jnp.tile(b3, W).reshape(1, W * Cout).astype(jnp.float32)

    n_blk = _images_per_step(N, H)
    m_blk = n_blk * H
    grid = (N // n_blk,)

    precision = (jax.lax.Precision.HIGHEST
                 if jnp.dtype(compute_dtype) == jnp.dtype(jnp.float32) else None)
    kernel = _make_fused_kernel(H, compute_dtype, precision)

    const3 = lambda n: (0, 0, 0)     # grid-invariant weights stay VMEM-resident
    const2 = lambda n: (0, 0)

    out_ld = pl.pallas_call(
        kernel,
        out_shape=jax.ShapeDtypeStruct((N * H, W * Cout), x.dtype),
        grid_spec=pltpu.PrefetchScalarGridSpec(
            num_scalar_prefetch=0,
            grid=grid,
            in_specs=[
                pl.BlockSpec((m_blk, W * Cin), lambda n: (n, 0)),
                pl.BlockSpec((3, W * Cin, W * Cout), const3),
                pl.BlockSpec((1, W * Cout), const2),
                pl.BlockSpec((3, W * Cout, W * Cout), const3),
                pl.BlockSpec((1, W * Cout), const2),
                pl.BlockSpec((3, W * Cout, W * Cout), const3),
                pl.BlockSpec((1, W * Cout), const2),
            ],
            out_specs=pl.BlockSpec((m_blk, W * Cout), lambda n: (n, 0)),
        ),
        compiler_params=pltpu.CompilerParams(
            dimension_semantics=("parallel",),
            vmem_limit_bytes=32 * 1024 * 1024,
        ),
    )(x_ld, B1, bt1, B2, bt2, B3, bt3)

    out = out_ld.reshape(N, H, W, Cout)
    if data_format == "NCHW":
        out = jnp.transpose(out, (0, 3, 1, 2))
    return out


def init_params(key, in_channel, out_channel):
    """Deterministic synthetic parameters matching nn.Conv2d shapes (OIHW),
    converted to HWIO for the kernel wrapper."""
    keys = jax.random.split(key, 6)
    shapes_oihw = [
        (out_channel, in_channel, 3, 3),
        (out_channel, out_channel, 3, 3),
        (out_channel, out_channel, 3, 3),
    ]
    params = []
    for i, shp in enumerate(shapes_oihw):
        w_oihw = jax.random.normal(keys[2 * i], shp, dtype=jnp.float32) * 0.1
        b = jax.random.normal(keys[2 * i + 1], (shp[0],), dtype=jnp.float32) * 0.01
        w_hwio = jnp.transpose(w_oihw, (2, 3, 1, 0))  # OIHW -> HWIO
        params.append((w_hwio, b))
    return params


def _reference_forward(x_nchw, params):
    """Pure-JAX reference (lax conv, f32) for a correctness sanity check."""
    x = x_nchw
    for i, (w_hwio, b) in enumerate(params):
        y = jax.lax.conv_general_dilated(
            x, w_hwio,
            window_strides=(1, 1),
            padding=((1, 1), (1, 1)),
            dimension_numbers=("NCHW", "HWIO", "NCHW"),
        )
        y = y + b[None, :, None, None]
        if i < 2:
            y = jnp.maximum(y, 0.0)
        x = y
    return x


if __name__ == "__main__":
    key = jax.random.PRNGKey(0)
    k_x, k_p = jax.random.split(key)

    N, Cin, Cout, H, W = 2, 4, 8, 16, 16
    x = jax.random.normal(k_x, (N, Cin, H, W), dtype=jnp.float32)
    params = init_params(k_p, Cin, Cout)

    out = extract_context_forward(x, params)          # bf16 MXU path, f32 accumulate
    out = jax.block_until_ready(out)

    ref = _reference_forward(x, params)
    assert out.shape == (N, Cout, H, W)
    # bf16 MXU operands (f32 accumulation) vs. f32 reference -> relaxed tolerance.
    max_err = float(jnp.max(jnp.abs(out - ref)))
    assert jnp.allclose(out, ref, atol=5e-2, rtol=5e-2), max_err

    print("KERNEL_OK")
</pallas_src>

<mosaic_0001>
module attributes {stable_mosaic.version = 11 : i64} {
  func.func @kernel(%arg0: i32, %arg1: memref<16x64xbf16, #tpu.memory_space<vmem>>, %arg2: memref<3x64x128xbf16, #tpu.memory_space<vmem>>, %arg3: memref<1x128xf32, #tpu.memory_space<vmem>>, %arg4: memref<3x128x128xbf16, #tpu.memory_space<vmem>>, %arg5: memref<1x128xf32, #tpu.memory_space<vmem>>, %arg6: memref<3x128x128xbf16, #tpu.memory_space<vmem>>, %arg7: memref<1x128xf32, #tpu.memory_space<vmem>>, %arg8: memref<16x128xf32, #tpu.memory_space<vmem>>) attributes {dimension_semantics = [#tpu.dimension_semantics<parallel>], iteration_bounds = array<i64: 2>, scalar_prefetch = 0 : i64, scratch_operands = 0 : i64, tpu.core_type = #tpu.core_type<tc>, window_params = [{transform_indices = @transform_0, window_bounds = array<i64: 16, 64>}, {pipeline_mode = #tpu.pipeline_mode<synchronous>, transform_indices = @transform_1, window_bounds = array<i64: 3, 64, 128>}, {pipeline_mode = #tpu.pipeline_mode<synchronous>, transform_indices = @transform_2, window_bounds = array<i64: 1, 128>}, {pipeline_mode = #tpu.pipeline_mode<synchronous>, transform_indices = @transform_3, window_bounds = array<i64: 3, 128, 128>}, {pipeline_mode = #tpu.pipeline_mode<synchronous>, transform_indices = @transform_4, window_bounds = array<i64: 1, 128>}, {pipeline_mode = #tpu.pipeline_mode<synchronous>, transform_indices = @transform_5, window_bounds = array<i64: 3, 128, 128>}, {pipeline_mode = #tpu.pipeline_mode<synchronous>, transform_indices = @transform_6, window_bounds = array<i64: 1, 128>}, {transform_indices = @transform_7, window_bounds = array<i64: 16, 128>}]} {
    %0 = tpu.iota {dimensions = array<i32: 0>} : vector<16x1xi32>
    %c16_i32 = arith.constant 16 : i32
    %c0_i32 = arith.constant 0 : i32
    %1 = arith.cmpi eq, %c16_i32, %c0_i32 : i32
    %c1_i32 = arith.constant 1 : i32
    %2 = arith.select %1, %c1_i32, %c16_i32 : i32
    %3 = vector.broadcast %2 : i32 to vector<16x1xi32>
    %4 = arith.remsi %0, %3 : vector<16x1xi32>
    %c0_i32_0 = arith.constant 0 : i32
    %5 = vector.broadcast %c0_i32_0 : i32 to vector<16x1xi32>
    %6 = arith.cmpi ne, %4, %5 : vector<16x1xi32>
    %c0_i32_1 = arith.constant 0 : i32
    %7 = vector.broadcast %c0_i32_1 : i32 to vector<16x1xi32>
    %8 = arith.cmpi slt, %4, %7 : vector<16x1xi32>
    %c0_i32_2 = arith.constant 0 : i32
    %9 = arith.cmpi slt, %2, %c0_i32_2 : i32
    %10 = vector.broadcast %9 : i1 to vector<16x1xi1>
    %11 = vector.broadcast %10 : vector<16x1xi1> to vector<16x1xi1>
    %12 = arith.xori %8, %11 : vector<16x1xi1>
    %13 = arith.andi %12, %6 : vector<16x1xi1>
    %14 = vector.broadcast %2 : i32 to vector<16x1xi32>
    %15 = arith.addi %4, %14 : vector<16x1xi32>
    %16 = arith.select %13, %15, %4 : vector<16x1xi1>, vector<16x1xi32>
    %c0_i32_3 = arith.constant 0 : i32
    %17 = vector.broadcast %c0_i32_3 : i32 to vector<16x1xi32>
    %18 = arith.cmpi ne, %16, %17 : vector<16x1xi32>
    %c15_i32 = arith.constant 15 : i32
    %19 = vector.broadcast %c15_i32 : i32 to vector<16x1xi32>
    %20 = arith.cmpi ne, %16, %19 : vector<16x1xi32>
    %c0 = arith.constant 0 : index
    %c0_4 = arith.constant 0 : index
    %21 = vector.load %arg1[%c0, %c0_4] : memref<16x64xbf16, #tpu.memory_space<vmem>>, vector<16x64xbf16>
    %22 = arith.extf %21 : vector<16x64xbf16> to vector<16x64xf32>
    %c1_i32_5 = arith.constant 1 : i32
    %23 = tpu.dynamic_rotate %22 by %c1_i32_5 dim 0 : vector<16x64xf32>, i32 -> vector<16x64xf32>
    %cst = arith.constant 0.000000e+00 : f32
    %24 = vector.shape_cast %18 : vector<16x1xi1> to vector<16x1xi1>
    %25 = vector.broadcast %24 : vector<16x1xi1> to vector<16x64xi1>
    %26 = vector.broadcast %cst : f32 to vector<16x64xf32>
    %27 = arith.select %25, %23, %26 : vector<16x64xi1>, vector<16x64xf32>
    %c15_i32_6 = arith.constant 15 : i32
    %28 = tpu.dynamic_rotate %22 by %c15_i32_6 dim 0 : vector<16x64xf32>, i32 -> vector<16x64xf32>
    %cst_7 = arith.constant 0.000000e+00 : f32
    %29 = vector.shape_cast %20 : vector<16x1xi1> to vector<16x1xi1>
    %30 = vector.broadcast %29 : vector<16x1xi1> to vector<16x64xi1>
    %31 = vector.broadcast %cst_7 : f32 to vector<16x64xf32>
    %32 = arith.select %30, %28, %31 : vector<16x64xi1>, vector<16x64xf32>
    %33 = arith.truncf %27 : vector<16x64xf32> to vector<16x64xbf16>
    %c0_8 = arith.constant 0 : index
    %c0_9 = arith.constant 0 : index
    %c0_10 = arith.constant 0 : index
    %34 = vector.load %arg2[%c0_8, %c0_9, %c0_10] : memref<3x64x128xbf16, #tpu.memory_space<vmem>>, vector<1x64x128xbf16>
    %35 = vector.shape_cast %34 : vector<1x64x128xbf16> to vector<64x128xbf16>
    %cst_11 = arith.constant dense<0.000000e+00> : vector<16x128xf32>
    %36 = tpu.matmul %33, %35, %cst_11 {dimension_numbers = #tpu.dot_dimension_numbers<[1], [0], [0], [1], [0, 0, 1, 1], [], []>} : vector<16x64xbf16>, vector<64x128xbf16>, vector<16x128xf32> -> vector<16x128xf32>
    %37 = arith.truncf %22 : vector<16x64xf32> to vector<16x64xbf16>
    %c1 = arith.constant 1 : index
    %c0_12 = arith.constant 0 : index
    %c0_13 = arith.constant 0 : index
    %38 = vector.load %arg2[%c1, %c0_12, %c0_13] : memref<3x64x128xbf16, #tpu.memory_space<vmem>>, vector<1x64x128xbf16>
    %39 = vector.shape_cast %38 : vector<1x64x128xbf16> to vector<64x128xbf16>
    %cst_14 = arith.constant dense<0.000000e+00> : vector<16x128xf32>
    %40 = tpu.matmul %37, %39, %cst_14 {dimension_numbers = #tpu.dot_dimension_numbers<[1], [0], [0], [1], [0, 0, 1, 1], [], []>} : vector<16x64xbf16>, vector<64x128xbf16>, vector<16x128xf32> -> vector<16x128xf32>
    %41 = arith.addf %36, %40 : vector<16x128xf32>
    %42 = arith.truncf %32 : vector<16x64xf32> to vector<16x64xbf16>
    %c2 = arith.constant 2 : index
    %c0_15 = arith.constant 0 : index
    %c0_16 = arith.constant 0 : index
    %43 = vector.load %arg2[%c2, %c0_15, %c0_16] : memref<3x64x128xbf16, #tpu.memory_space<vmem>>, vector<1x64x128xbf16>
    %44 = vector.shape_cast %43 : vector<1x64x128xbf16> to vector<64x128xbf16>
    %cst_17 = arith.constant dense<0.000000e+00> : vector<16x128xf32>
    %45 = tpu.matmul %42, %44, %cst_17 {dimension_numbers = #tpu.dot_dimension_numbers<[1], [0], [0], [1], [0, 0, 1, 1], [], []>} : vector<16x64xbf16>, vector<64x128xbf16>, vector<16x128xf32> -> vector<16x128xf32>
    %46 = arith.addf %41, %45 : vector<16x128xf32>
    %c0_18 = arith.constant 0 : index
    %c0_19 = arith.constant 0 : index
    %47 = vector.load %arg3[%c0_18, %c0_19] : memref<1x128xf32, #tpu.memory_space<vmem>>, vector<1x128xf32>
    %48 = vector.broadcast %47 : vector<1x128xf32> to vector<16x128xf32>
    %49 = arith.addf %46, %48 : vector<16x128xf32>
    %cst_20 = arith.constant 0.000000e+00 : f32
    %50 = vector.broadcast %cst_20 : f32 to vector<16x128xf32>
    %51 = arith.maximumf %49, %50 : vector<16x128xf32>
    %c1_i32_21 = arith.constant 1 : i32
    %52 = tpu.dynamic_rotate %51 by %c1_i32_21 dim 0 : vector<16x128xf32>, i32 -> vector<16x128xf32>
    %cst_22 = arith.constant 0.000000e+00 : f32
    %53 = vector.shape_cast %18 : vector<16x1xi1> to vector<16x1xi1>
    %54 = vector.broadcast %53 : vector<16x1xi1> to vector<16x128xi1>
    %55 = vector.broadcast %cst_22 : f32 to vector<16x128xf32>
    %56 = arith.select %54, %52, %55 : vector<16x128xi1>, vector<16x128xf32>
    %c15_i32_23 = arith.constant 15 : i32
    %57 = tpu.dynamic_rotate %51 by %c15_i32_23 dim 0 : vector<16x128xf32>, i32 -> vector<16x128xf32>
    %cst_24 = arith.constant 0.000000e+00 : f32
    %58 = vector.shape_cast %20 : vector<16x1xi1> to vector<16x1xi1>
    %59 = vector.broadcast %58 : vector<16x1xi1> to vector<16x128xi1>
    %60 = vector.broadcast %cst_24 : f32 to vector<16x128xf32>
    %61 = arith.select %59, %57, %60 : vector<16x128xi1>, vector<16x128xf32>
    %62 = arith.truncf %56 : vector<16x128xf32> to vector<16x128xbf16>
    %c0_25 = arith.constant 0 : index
    %c0_26 = arith.constant 0 : index
    %c0_27 = arith.constant 0 : index
    %63 = vector.load %arg4[%c0_25, %c0_26, %c0_27] : memref<3x128x128xbf16, #tpu.memory_space<vmem>>, vector<1x128x128xbf16>
    %64 = vector.shape_cast %63 : vector<1x128x128xbf16> to vector<128x128xbf16>
    %cst_28 = arith.constant dense<0.000000e+00> : vector<16x128xf32>
    %65 = tpu.matmul %62, %64, %cst_28 {dimension_numbers = #tpu.dot_dimension_numbers<[1], [0], [0], [1], [0, 0, 1, 1], [], []>} : vector<16x128xbf16>, vector<128x128xbf16>, vector<16x128xf32> -> vector<16x128xf32>
    %66 = arith.truncf %51 : vector<16x128xf32> to vector<16x128xbf16>
    %c1_29 = arith.constant 1 : index
    %c0_30 = arith.constant 0 : index
    %c0_31 = arith.constant 0 : index
    %67 = vector.load %arg4[%c1_29, %c0_30, %c0_31] : memref<3x128x128xbf16, #tpu.memory_space<vmem>>, vector<1x128x128xbf16>
    %68 = vector.shape_cast %67 : vector<1x128x128xbf16> to vector<128x128xbf16>
    %cst_32 = arith.constant dense<0.000000e+00> : vector<16x128xf32>
    %69 = tpu.matmul %66, %68, %cst_32 {dimension_numbers = #tpu.dot_dimension_numbers<[1], [0], [0], [1], [0, 0, 1, 1], [], []>} : vector<16x128xbf16>, vector<128x128xbf16>, vector<16x128xf32> -> vector<16x128xf32>
    %70 = arith.addf %65, %69 : vector<16x128xf32>
    %71 = arith.truncf %61 : vector<16x128xf32> to vector<16x128xbf16>
    %c2_33 = arith.constant 2 : index
    %c0_34 = arith.constant 0 : index
    %c0_35 = arith.constant 0 : index
    %72 = vector.load %arg4[%c2_33, %c0_34, %c0_35] : memref<3x128x128xbf16, #tpu.memory_space<vmem>>, vector<1x128x128xbf16>
    %73 = vector.shape_cast %72 : vector<1x128x128xbf16> to vector<128x128xbf16>
    %cst_36 = arith.constant dense<0.000000e+00> : vector<16x128xf32>
    %74 = tpu.matmul %71, %73, %cst_36 {dimension_numbers = #tpu.dot_dimension_numbers<[1], [0], [0], [1], [0, 0, 1, 1], [], []>} : vector<16x128xbf16>, vector<128x128xbf16>, vector<16x128xf32> -> vector<16x128xf32>
    %75 = arith.addf %70, %74 : vector<16x128xf32>
    %c0_37 = arith.constant 0 : index
    %c0_38 = arith.constant 0 : index
    %76 = vector.load %arg5[%c0_37, %c0_38] : memref<1x128xf32, #tpu.memory_space<vmem>>, vector<1x128xf32>
    %77 = vector.broadcast %76 : vector<1x128xf32> to vector<16x128xf32>
    %78 = arith.addf %75, %77 : vector<16x128xf32>
    %cst_39 = arith.constant 0.000000e+00 : f32
    %79 = vector.broadcast %cst_39 : f32 to vector<16x128xf32>
    %80 = arith.maximumf %78, %79 : vector<16x128xf32>
    %c1_i32_40 = arith.constant 1 : i32
    %81 = tpu.dynamic_rotate %80 by %c1_i32_40 dim 0 : vector<16x128xf32>, i32 -> vector<16x128xf32>
    %cst_41 = arith.constant 0.000000e+00 : f32
    %82 = vector.shape_cast %18 : vector<16x1xi1> to vector<16x1xi1>
    %83 = vector.broadcast %82 : vector<16x1xi1> to vector<16x128xi1>
    %84 = vector.broadcast %cst_41 : f32 to vector<16x128xf32>
    %85 = arith.select %83, %81, %84 : vector<16x128xi1>, vector<16x128xf32>
    %c15_i32_42 = arith.constant 15 : i32
    %86 = tpu.dynamic_rotate %80 by %c15_i32_42 dim 0 : vector<16x128xf32>, i32 -> vector<16x128xf32>
    %cst_43 = arith.constant 0.000000e+00 : f32
    %87 = vector.shape_cast %20 : vector<16x1xi1> to vector<16x1xi1>
    %88 = vector.broadcast %87 : vector<16x1xi1> to vector<16x128xi1>
    %89 = vector.broadcast %cst_43 : f32 to vector<16x128xf32>
    %90 = arith.select %88, %86, %89 : vector<16x128xi1>, vector<16x128xf32>
    %91 = arith.truncf %85 : vector<16x128xf32> to vector<16x128xbf16>
    %c0_44 = arith.constant 0 : index
    %c0_45 = arith.constant 0 : index
    %c0_46 = arith.constant 0 : index
    %92 = vector.load %arg6[%c0_44, %c0_45, %c0_46] : memref<3x128x128xbf16, #tpu.memory_space<vmem>>, vector<1x128x128xbf16>
    %93 = vector.shape_cast %92 : vector<1x128x128xbf16> to vector<128x128xbf16>
    %cst_47 = arith.constant dense<0.000000e+00> : vector<16x128xf32>
    %94 = tpu.matmul %91, %93, %cst_47 {dimension_numbers = #tpu.dot_dimension_numbers<[1], [0], [0], [1], [0, 0, 1, 1], [], []>} : vector<16x128xbf16>, vector<128x128xbf16>, vector<16x128xf32> -> vector<16x128xf32>
    %95 = arith.truncf %80 : vector<16x128xf32> to vector<16x128xbf16>
    %c1_48 = arith.constant 1 : index
    %c0_49 = arith.constant 0 : index
    %c0_50 = arith.constant 0 : index
    %96 = vector.load %arg6[%c1_48, %c0_49, %c0_50] : memref<3x128x128xbf16, #tpu.memory_space<vmem>>, vector<1x128x128xbf16>
    %97 = vector.shape_cast %96 : vector<1x128x128xbf16> to vector<128x128xbf16>
    %cst_51 = arith.constant dense<0.000000e+00> : vector<16x128xf32>
    %98 = tpu.matmul %95, %97, %cst_51 {dimension_numbers = #tpu.dot_dimension_numbers<[1], [0], [0], [1], [0, 0, 1, 1], [], []>} : vector<16x128xbf16>, vector<128x128xbf16>, vector<16x128xf32> -> vector<16x128xf32>
    %99 = arith.addf %94, %98 : vector<16x128xf32>
    %100 = arith.truncf %90 : vector<16x128xf32> to vector<16x128xbf16>
    %c2_52 = arith.constant 2 : index
    %c0_53 = arith.constant 0 : index
    %c0_54 = arith.constant 0 : index
    %101 = vector.load %arg6[%c2_52, %c0_53, %c0_54] : memref<3x128x128xbf16, #tpu.memory_space<vmem>>, vector<1x128x128xbf16>
    %102 = vector.shape_cast %101 : vector<1x128x128xbf16> to vector<128x128xbf16>
    %cst_55 = arith.constant dense<0.000000e+00> : vector<16x128xf32>
    %103 = tpu.matmul %100, %102, %cst_55 {dimension_numbers = #tpu.dot_dimension_numbers<[1], [0], [0], [1], [0, 0, 1, 1], [], []>} : vector<16x128xbf16>, vector<128x128xbf16>, vector<16x128xf32> -> vector<16x128xf32>
    %104 = arith.addf %99, %103 : vector<16x128xf32>
    %c0_56 = arith.constant 0 : index
    %c0_57 = arith.constant 0 : index
    %105 = vector.load %arg7[%c0_56, %c0_57] : memref<1x128xf32, #tpu.memory_space<vmem>>, vector<1x128xf32>
    %106 = vector.broadcast %105 : vector<1x128xf32> to vector<16x128xf32>
    %107 = arith.addf %104, %106 : vector<16x128xf32>
    %c0_58 = arith.constant 0 : index
    %c0_59 = arith.constant 0 : index
    %108 = vector.load %arg8[%c0_58, %c0_59] : memref<16x128xf32, #tpu.memory_space<vmem>>, vector<16x128xf32>
    tpu.vector_store %arg8[%c0_58, %c0_59], %107 {strides = array<i32>} : memref<16x128xf32, #tpu.memory_space<vmem>>, vector<16x128xf32>,
    return
  }
  func.func @transform_0(%arg0: i32) -> (i32, i32) {
    %c0_i32 = arith.constant 0 : i32
    %c0_i32_0 = arith.constant 0 : i32
    return %arg0, %c0_i32 : i32, i32
  }
  func.func @transform_1(%arg0: i32) -> (i32, i32, i32) {
    %c0_i32 = arith.constant 0 : i32
    %c0_i32_0 = arith.constant 0 : i32
    %c0_i32_1 = arith.constant 0 : i32
    %c0_i32_2 = arith.constant 0 : i32
    return %c0_i32, %c0_i32_0, %c0_i32_1 : i32, i32, i32
  }
  func.func @transform_2(%arg0: i32) -> (i32, i32) {
    %c0_i32 = arith.constant 0 : i32
    %c0_i32_0 = arith.constant 0 : i32
    %c0_i32_1 = arith.constant 0 : i32
    return %c0_i32, %c0_i32_0 : i32, i32
  }
  func.func @transform_3(%arg0: i32) -> (i32, i32, i32) {
    %c0_i32 = arith.constant 0 : i32
    %c0_i32_0 = arith.constant 0 : i32
    %c0_i32_1 = arith.constant 0 : i32
    %c0_i32_2 = arith.constant 0 : i32
    return %c0_i32, %c0_i32_0, %c0_i32_1 : i32, i32, i32
  }
  func.func @transform_4(%arg0: i32) -> (i32, i32) {
    %c0_i32 = arith.constant 0 : i32
    %c0_i32_0 = arith.constant 0 : i32
    %c0_i32_1 = arith.constant 0 : i32
    return %c0_i32, %c0_i32_0 : i32, i32
  }
  func.func @transform_5(%arg0: i32) -> (i32, i32, i32) {
    %c0_i32 = arith.constant 0 : i32
    %c0_i32_0 = arith.constant 0 : i32
    %c0_i32_1 = arith.constant 0 : i32
    %c0_i32_2 = arith.constant 0 : i32
    return %c0_i32, %c0_i32_0, %c0_i32_1 : i32, i32, i32
  }
  func.func @transform_6(%arg0: i32) -> (i32, i32) {
    %c0_i32 = arith.constant 0 : i32
    %c0_i32_0 = arith.constant 0 : i32
    %c0_i32_1 = arith.constant 0 : i32
    return %c0_i32, %c0_i32_0 : i32, i32
  }
  func.func @transform_7(%arg0: i32) -> (i32, i32) {
    %c0_i32 = arith.constant 0 : i32
    %c0_i32_0 = arith.constant 0 : i32
    return %arg0, %c0_i32 : i32, i32
  }
}

</mosaic_0001>

<llo_original>
// kernel: tpu_custom_call.1
$region0: #{tpu_custom_call.1}
  #allocation0 [shape = 'u32[]', space=smem, size = 0x4, offset = 0x4, fixed_abs, tag = 'smem constant byte address 0x4 - core index']
  #allocation1 [shape = 'u32[144,128]{1,0:T(1,128)}', space=vmem, size = 0x12000, scoped, tag = 'internal scratch']
  %s0 = inlined_call_operand.hbm [shape: bf16[32,64], index: 0, kind: input, shape index: {}]
  %s1 = inlined_call_operand.hbm [shape: bf16[3,64,128], index: 1, kind: input, shape index: {}]
  %s2 = inlined_call_operand.vmem [shape: f32[1,128], index: 2, kind: input, shape index: {}]
  %s3 = inlined_call_operand.hbm [shape: bf16[3,128,128], index: 3, kind: input, shape index: {}]
  %s4 = inlined_call_operand.vmem [shape: f32[1,128], index: 4, kind: input, shape index: {}]
  %s5 = inlined_call_operand.hbm [shape: bf16[3,128,128], index: 5, kind: input, shape index: {}]
  %s6 = inlined_call_operand.vmem [shape: f32[1,128], index: 6, kind: input, shape index: {}]
  %s7 = inlined_call_operand.hbm [shape: f32[32,128], index: 7, kind: output, shape index: {}]
  %s8 = sld [smem:[#allocation0]]
  $region77: #{tpu_custom_call.1} parent=0
    _
  %s10 = ssub.s32 1, %s8
  %s11 = scalar_select 0, %s10, %s8
  $region1: #{tpu_custom_call.1} parent=0
    #allocation2 [shape = 'u8[8192]{0}', space=vmem, size = 0x2000, scoped, tag = 'input window, operand 0']
    #allocation3 [shape = 's32[2]{0}', space=sflag, size = 0x8, scoped, tag = 'scoped memory for tpu_custom_call.1']
    #allocation4 [shape = 's32[2]{0}', space=sflag, size = 0x8, scoped, tag = 'scoped memory for tpu_custom_call.1']
    #allocation5 [shape = 'u8[49152]{0}', space=vmem, size = 0xc000, scoped, tag = 'input window, operand 1, single buffered']
    #allocation6 [shape = 's32[1]{0}', space=sflag, size = 0x4, scoped, tag = 'scoped memory for tpu_custom_call.1']
    #allocation7 [shape = 'u8[98304]{0}', space=vmem, size = 0x18000, scoped, tag = 'input window, operand 3, single buffered']
    #allocation8 [shape = 'u8[98304]{0}', space=vmem, size = 0x18000, scoped, tag = 'input window, operand 5, single buffered']
    #allocation9 [shape = 's32[1]{0}', space=sflag, size = 0x4, scoped, tag = 'scoped memory for tpu_custom_call.1']
    #allocation10 [shape = 'u8[16384]{0}', space=vmem, size = 0x4000, scoped, tag = 'output window, operand 0']
    %12 = vsyncpa [#allocation3], 0
    %s13 = scalar_lea.sflag [#allocation3], 1
    %14 = vsyncpa %s13, 0
    %15 = vsyncpa [#allocation6], 0
    %16 = vsyncpa [#allocation9], 0
    %17 = vsyncpa [#allocation4], 0
    %s18 = scalar_lea.sflag [#allocation4], 1
    %19 = vsyncpa %s18, 0
    loop: start=0, step=1, limit=4
    $region2: #{tpu_custom_call.1} parent=1 // loop_pre_header
      _
    $region3: #{tpu_custom_call.1} parent=1 // loop_header
      %s21 = sphi 0, %s25
      %p22 = scmp.ge.s32.totalorder %s21, 4
      %s31 = sphi 0, %s33
      %s34 = sphi 0, %s31
      %s35 = sphi 0, %s34
      %s51 = sphi 0, %s35
      %s55 = sphi 0, %s55
      %s57 = sphi 0, %s55
      %s58 = sphi 0, %s57
      %s72 = sphi 0, %s58
      %s76 = sphi 0, %s76
      %s78 = sphi 0, %s76
      %s79 = sphi 0, %s78
      %s93 = sphi 0, %s79
      %s97 = sphi 0, %s97
      %s99 = sphi 0, %s97
      %s100 = sphi 0, %s99
      %s114 = sphi 0, %s100
      %s118 = sphi 0, %s118
      %s120 = sphi 0, %s118
      %s121 = sphi 0, %s120
      %s135 = sphi 0, %s121
      %s139 = sphi 0, %s139
      %s141 = sphi 0, %s139
      %s142 = sphi 0, %s141
      %s156 = sphi 0, %s142
      %s160 = sphi 0, %s160
      %s162 = sphi 0, %s160
      %s163 = sphi 0, %s162
      %s177 = sphi 0, %s163
      %s183 = sphi 0, %s185
      %s186 = sphi 0, %s183
      %s187 = sphi 0, %s186
      %s203 = sphi 0, %s187
    $region4: #{tpu_custom_call.1} parent=1 // loop_header_branch
      %24 = sbr.rel (%p22) target = $region8
    $region5: #{tpu_custom_call.1} parent=1 // loop_body
      %s26 = ssub.s32 %s21, 1
      %s27 = ssub.s32 %s21, 2
      %s28 = sadd.s32 %s21, 1
      %s29 = ssub.s32 %s21, %s28
      %p30 = scmp.eq.s32.totalorder %s29, 0
      %s32 = sadd.s32 %s31, 1
      %s33 = scalar_select %p30, %s31, %s32
      %p36 = pneg %p30
      %p37 = scmp.eq.s32.totalorder %s21, 1
      %p38 = por %p36, %p37
      %p39 = scmp.ne.s32.totalorder %s31, %s34
      %p40 = scmp.eq.s32.totalorder %s21, 0
      %p41 = por %p39, %p40
      %p42 = scmp.ne.s32.totalorder %s31, %s34
      %p43 = scmp.eq.s32.totalorder %s26, 1
      %p44 = por %p42, %p43
      %p45 = scmp.ne.s32.totalorder %s34, %s35
      %p46 = scmp.eq.s32.totalorder %s26, 0
      %p47 = por %p45, %p46
      %p48 = scmp.ne.s32.totalorder %s34, %s35
      %p49 = scmp.eq.s32.totalorder %s27, 1
      %p50 = por %p48, %p49
      %p52 = scmp.ne.s32.totalorder %s35, %s51
      %p53 = scmp.eq.s32.totalorder %s27, 0
      %p54 = por %p52, %p53
      %s56 = sadd.s32 %s55, 1
      %p59 = scmp.eq.s32.totalorder %s21, 1
      %p60 = scmp.ne.s32.totalorder %s55, %s57
      %p61 = scmp.eq.s32.totalorder %s21, 0
      %p62 = por %p60, %p61
      %p63 = scmp.ne.s32.totalorder %s55, %s57
      %p64 = scmp.eq.s32.totalorder %s26, 1
      %p65 = por %p63, %p64
      %p66 = scmp.ne.s32.totalorder %s57, %s58
      %p67 = scmp.eq.s32.totalorder %s26, 0
      %p68 = por %p66, %p67
      %p69 = scmp.ne.s32.totalorder %s57, %s58
      %p70 = scmp.eq.s32.totalorder %s27, 1
      %p71 = por %p69, %p70
      %p73 = scmp.ne.s32.totalorder %s58, %s72
      %p74 = scmp.eq.s32.totalorder %s27, 0
      %p75 = por %p73, %p74
      %s77 = sadd.s32 %s76, 1
      %p80 = scmp.eq.s32.totalorder %s21, 1
      %p81 = scmp.ne.s32.totalorder %s76, %s78
      %p82 = scmp.eq.s32.totalorder %s21, 0
      %p83 = por %p81, %p82
      %p84 = scmp.ne.s32.totalorder %s76, %s78
      %p85 = scmp.eq.s32.totalorder %s26, 1
      %p86 = por %p84, %p85
      %p87 = scmp.ne.s32.totalorder %s78, %s79
      %p88 = scmp.eq.s32.totalorder %s26, 0
      %p89 = por %p87, %p88
      %p90 = scmp.ne.s32.totalorder %s78, %s79
      %p91 = scmp.eq.s32.totalorder %s27, 1
      %p92 = por %p90, %p91
      %p94 = scmp.ne.s32.totalorder %s79, %s93
      %p95 = scmp.eq.s32.totalorder %s27, 0
      %p96 = por %p94, %p95
      %s98 = sadd.s32 %s97, 1
      %p101 = scmp.eq.s32.totalorder %s21, 1
      %p102 = scmp.ne.s32.totalorder %s97, %s99
      %p103 = scmp.eq.s32.totalorder %s21, 0
      %p104 = por %p102, %p103
      %p105 = scmp.ne.s32.totalorder %s97, %s99
      %p106 = scmp.eq.s32.totalorder %s26, 1
      %p107 = por %p105, %p106
      %p108 = scmp.ne.s32.totalorder %s99, %s100
      %p109 = scmp.eq.s32.totalorder %s26, 0
      %p110 = por %p108, %p109
      %p111 = scmp.ne.s32.totalorder %s99, %s100
      %p112 = scmp.eq.s32.totalorder %s27, 1
      %p113 = por %p111, %p112
      %p115 = scmp.ne.s32.totalorder %s100, %s114
      %p116 = scmp.eq.s32.totalorder %s27, 0
      %p117 = por %p115, %p116
      %s119 = sadd.s32 %s118, 1
      %p122 = scmp.eq.s32.totalorder %s21, 1
      %p123 = scmp.ne.s32.totalorder %s118, %s120
      %p124 = scmp.eq.s32.totalorder %s21, 0
      %p125 = por %p123, %p124
      %p126 = scmp.ne.s32.totalorder %s118, %s120
      %p127 = scmp.eq.s32.totalorder %s26, 1
      %p128 = por %p126, %p127
      %p129 = scmp.ne.s32.totalorder %s120, %s121
      %p130 = scmp.eq.s32.totalorder %s26, 0
      %p131 = por %p129, %p130
      %p132 = scmp.ne.s32.totalorder %s120, %s121
      %p133 = scmp.eq.s32.totalorder %s27, 1
      %p134 = por %p132, %p133
      %p136 = scmp.ne.s32.totalorder %s121, %s135
      %p137 = scmp.eq.s32.totalorder %s27, 0
      %p138 = por %p136, %p137
      %s140 = sadd.s32 %s139, 1
      %p143 = scmp.eq.s32.totalorder %s21, 1
      %p144 = scmp.ne.s32.totalorder %s139, %s141
      %p145 = scmp.eq.s32.totalorder %s21, 0
      %p146 = por %p144, %p145
      %p147 = scmp.ne.s32.totalorder %s139, %s141
      %p148 = scmp.eq.s32.totalorder %s26, 1
      %p149 = por %p147, %p148
      %p150 = scmp.ne.s32.totalorder %s141, %s142
      %p151 = scmp.eq.s32.totalorder %s26, 0
      %p152 = por %p150, %p151
      %p153 = scmp.ne.s32.totalorder %s141, %s142
      %p154 = scmp.eq.s32.totalorder %s27, 1
      %p155 = por %p153, %p154
      %p157 = scmp.ne.s32.totalorder %s142, %s156
      %p158 = scmp.eq.s32.totalorder %s27, 0
      %p159 = por %p157, %p158
      %s161 = sadd.s32 %s160, 1
      %p164 = scmp.eq.s32.totalorder %s21, 1
      %p165 = scmp.ne.s32.totalorder %s160, %s162
      %p166 = scmp.eq.s32.totalorder %s21, 0
      %p167 = por %p165, %p166
      %p168 = scmp.ne.s32.totalorder %s160, %s162
      %p169 = scmp.eq.s32.totalorder %s26, 1
      %p170 = por %p168, %p169
      %p171 = scmp.ne.s32.totalorder %s162, %s163
      %p172 = scmp.eq.s32.totalorder %s26, 0
      %p173 = por %p171, %p172
      %p174 = scmp.ne.s32.totalorder %s162, %s163
      %p175 = scmp.eq.s32.totalorder %s27, 1
      %p176 = por %p174, %p175
      %p178 = scmp.ne.s32.totalorder %s163, %s177
      %p179 = scmp.eq.s32.totalorder %s27, 0
      %p180 = por %p178, %p179
      %s181 = ssub.s32 %s21, %s28
      %p182 = scmp.eq.s32.totalorder %s181, 0
      %s184 = sadd.s32 %s183, 1
      %s185 = scalar_select %p182, %s183, %s184
      %p188 = pneg %p182
      %p189 = scmp.eq.s32.totalorder %s21, 1
      %p190 = por %p188, %p189
      %p191 = scmp.ne.s32.totalorder %s183, %s186
      %p192 = scmp.eq.s32.totalorder %s21, 0
      %p193 = por %p191, %p192
      %p194 = scmp.ne.s32.totalorder %s183, %s186
      %p195 = scmp.eq.s32.totalorder %s26, 1
      %p196 = por %p194, %p195
      %p197 = scmp.ne.s32.totalorder %s186, %s187
      %p198 = scmp.eq.s32.totalorder %s26, 0
      %p199 = por %p197, %p198
      %p200 = scmp.ne.s32.totalorder %s186, %s187
      %p201 = scmp.eq.s32.totalorder %s27, 1
      %p202 = por %p200, %p201
      %p204 = scmp.ne.s32.totalorder %s187, %s203
      %p205 = scmp.eq.s32.totalorder %s27, 0
      %p206 = por %p204, %p205
      %p207 = scmp.le.s32.totalorder 1, %s21
      %p208 = scmp.lt.s32.totalorder %s21, 3
      %p209 = pnand %p207, %p208
      %p210 = pneg %p209
      // Predicated region
      $region9: #{tpu_custom_call.1} parent=5 // pred_check
        _
      $region10: #{tpu_custom_call.1} parent=5 // pred_check_branch
        %212 = sbr.rel (%p209) target = $region12
      $region11: #{tpu_custom_call.1} parent=5 // pred_region
        %s213 = ssub.s32 %s21, 1
        // Predicated region
        $region13: #{tpu_custom_call.1} parent=11 // pred_check
          %p214 = pneg %p68
        $region14: #{tpu_custom_call.1} parent=11 // pred_check_branch
          %216 = sbr.rel (%p214) target = $region16
        $region15: #{tpu_custom_call.1} parent=11 // pred_region
          %s218 = ssub.s32 1536, 1536
          %219 = vsyncadd [#allocation6], %s218
          %s220 = sshll.u32 [#allocation5], 4
          %s221 = int_to_ptr.vmem [resolvable:$true] %s220
          %226 = dma.hbm_to_vmem [thread:$0]  %s1, 1536, %s221, [#allocation6], 64, 64, 4
        $region16: #{tpu_custom_call.1} parent=11 // pred_fallthru
          _
        // Predicated region
        $region17: #{tpu_custom_call.1} parent=11 // pred_check
          %p227 = pneg %p89
        $region18: #{tpu_custom_call.1} parent=11 // pred_check_branch
          %229 = sbr.rel (%p227) target = $region20
        $region19: #{tpu_custom_call.1} parent=11 // pred_region
          _
        $region20: #{tpu_custom_call.1} parent=11 // pred_fallthru
          _
        // Predicated region
        $region21: #{tpu_custom_call.1} parent=11 // pred_check
          %p230 = pneg %p110
        $region22: #{tpu_custom_call.1} parent=11 // pred_check_branch
          %232 = sbr.rel (%p230) target = $region24
        $region23: #{tpu_custom_call.1} parent=11 // pred_region
          %s234 = ssub.s32 3072, 3072
          %235 = vsyncadd [#allocation6], %s234
          %s236 = sshll.u32 [#allocation7], 4
          %s237 = int_to_ptr.vmem [resolvable:$true] %s236
          %242 = dma.hbm_to_vmem [thread:$0]  %s3, 3072, %s237, [#allocation6], 64, 64, 4
        $region24: #{tpu_custom_call.1} parent=11 // pred_fallthru
          _
        // Predicated region
        $region25: #{tpu_custom_call.1} parent=11 // pred_check
          %p243 = pneg %p131
        $region26: #{tpu_custom_call.1} parent=11 // pred_check_branch
          %245 = sbr.rel (%p243) target = $region28
        $region27: #{tpu_custom_call.1} parent=11 // pred_region
          _
        $region28: #{tpu_custom_call.1} parent=11 // pred_fallthru
          _
        // Predicated region
        $region29: #{tpu_custom_call.1} parent=11 // pred_check
          %p246 = pneg %p152
        $region30: #{tpu_custom_call.1} parent=11 // pred_check_branch
          %248 = sbr.rel (%p246) target = $region32
        $region31: #{tpu_custom_call.1} parent=11 // pred_region
          %s250 = ssub.s32 3072, 3072
          %251 = vsyncadd [#allocation9], %s250
          %s252 = sshll.u32 [#allocation8], 4
          %s253 = int_to_ptr.vmem [resolvable:$true] %s252
          %258 = dma.hbm_to_vmem [thread:$0]  %s5, 3072, %s253, [#allocation9], 64, 64, 4
        $region32: #{tpu_custom_call.1} parent=11 // pred_fallthru
          _
        // Predicated region
        $region33: #{tpu_custom_call.1} parent=11 // pred_check
          %p259 = pneg %p173
        $region34: #{tpu_custom_call.1} parent=11 // pred_check_branch
          %261 = sbr.rel (%p259) target = $region36
        $region35: #{tpu_custom_call.1} parent=11 // pred_region
          _
        $region36: #{tpu_custom_call.1} parent=11 // pred_fallthru
          _
      $region12: #{tpu_custom_call.1} parent=5 // pred_fallthru
        _
      %p262 = scmp.lt.s32.totalorder %s21, 2
      // Predicated region
      $region37: #{tpu_custom_call.1} parent=5 // pred_check
        %p263 = pneg %p262
      $region38: #{tpu_custom_call.1} parent=5 // pred_check_branch
        %265 = sbr.rel (%p263) target = $region40
      $region39: #{tpu_custom_call.1} parent=5 // pred_region
        // Predicated region
        $region41: #{tpu_custom_call.1} parent=39 // pred_check
          %p266 = pneg %p41
        $region42: #{tpu_custom_call.1} parent=39 // pred_check_branch
          %268 = sbr.rel (%p266) target = $region44
        $region43: #{tpu_custom_call.1} parent=39 // pred_region
          %s269 = sand.u32 %s31, 1
          %s270 = scalar_lea.sflag [#allocation3], %s269
          %s271 = sand.u32 %s31, 1
          %s272 = smul.addr %s271, 8
          %s273 = scalar_lea.vmem [#allocation2], %s272
          %s274 = smul.u32 2, %s21
          %s276 = ssub.s32 128, 128
          %277 = vsyncadd %s270, %s276
          %s278 = smul.addr %s274, 64
          %s279 = scalar_lea.hbm %s0, %s278
          %s280 = sshll.u32 %s273, 4
          %s281 = int_to_ptr.vmem [resolvable:$true] %s280
          %286 = dma.hbm_to_vmem [thread:$0]  %s279, 128, %s281, %s270, 64, 64, 4
        $region44: #{tpu_custom_call.1} parent=39 // pred_fallthru
          _
      $region40: #{tpu_custom_call.1} parent=5 // pred_fallthru
        _
      %p287 = scmp.le.s32.totalorder 1, %s21
      %p288 = scmp.lt.s32.totalorder %s21, 3
      %p289 = pnand %p287, %p288
      %p290 = pneg %p289
      // Predicated region
      $region45: #{tpu_custom_call.1} parent=5 // pred_check
        _
      $region46: #{tpu_custom_call.1} parent=5 // pred_check_branch
        %292 = sbr.rel (%p289) target = $region48
      $region47: #{tpu_custom_call.1} parent=5 // pred_region
        %s293 = ssub.s32 %s21, 1
        %s294 = sand.u32 %s34, 1
        %s295 = scalar_lea.sflag [#allocation3], %s294
        %s296 = sand.u32 %s34, 1
        %s297 = smul.addr %s296, 8
        %s298 = scalar_lea.vmem [#allocation2], %s297
        // Predicated region
        $region49: #{tpu_custom_call.1} parent=47 // pred_check
          %p299 = pneg %p47
        $region50: #{tpu_custom_call.1} parent=47 // pred_check_branch
          %301 = sbr.rel (%p299) target = $region52
        $region51: #{tpu_custom_call.1} parent=47 // pred_region
          %302 = dma.done %s295, 128
        $region52: #{tpu_custom_call.1} parent=47 // pred_fallthru
          _
        // Predicated region
        $region53: #{tpu_custom_call.1} parent=47 // pred_check
          %p303 = pneg %p68
        $region54: #{tpu_custom_call.1} parent=47 // pred_check_branch
          %305 = sbr.rel (%p303) target = $region56
        $region55: #{tpu_custom_call.1} parent=47 // pred_region
          %306 = dma.done [#allocation6], 1536
        $region56: #{tpu_custom_call.1} parent=47 // pred_fallthru
          _
        // Predicated region
        $region57: #{tpu_custom_call.1} parent=47 // pred_check
          %p307 = pneg %p110
        $region58: #{tpu_custom_call.1} parent=47 // pred_check_branch
          %309 = sbr.rel (%p307) target = $region60
        $region59: #{tpu_custom_call.1} parent=47 // pred_region
          %310 = dma.done [#allocation6], 3072
        $region60: #{tpu_custom_call.1} parent=47 // pred_fallthru
          _
        // Predicated region
        $region61: #{tpu_custom_call.1} parent=47 // pred_check
          %p311 = pneg %p152
        $region62: #{tpu_custom_call.1} parent=47 // pred_check_branch
          %313 = sbr.rel (%p311) target = $region64
        $region63: #{tpu_custom_call.1} parent=47 // pred_region
          %314 = dma.done [#allocation9], 3072
        $region64: #{tpu_custom_call.1} parent=47 // pred_fallthru
          _
        %s315 = sand.u32 %s34, 1
        %s316 = scalar_lea.sflag [#allocation3], %s315
        %s317 = sand.u32 %s34, 1
        %s318 = smul.addr %s317, 8
        %s319 = scalar_lea.vmem [#allocation2], %s318
        %p320 = pneg %p47
        %p321 = pneg %p44
        %p322 = pneg %p68
        %p323 = pneg %p65
        %p324 = pneg %p89
        %p325 = pneg %p86
        %p326 = pneg %p110
        %p327 = pneg %p107
        %p328 = pneg %p131
        %p329 = pneg %p128
        %p330 = pneg %p152
        %p331 = pneg %p149
        %p332 = pneg %p173
        %p333 = pneg %p170
        %p334 = pneg %p199
        %p335 = pneg %p196
        %s336 = sand.u32 %s186, 1
        %s337 = scalar_lea.sflag [#allocation4], %s336
        %s338 = sand.u32 %s186, 1
        %s339 = smul.addr %s338, 16
        %s340 = scalar_lea.vmem [#allocation10], %s339
        %s341 = smul.u32 2, %s26
        %s342 = smul.u32 2, %s26
        %v344 = vlaneseq
        %v345 = vshrl.u32 %v344, 7
        %v346 = vadd.s32 %v345, 8
        %vm347 = vcmp.lt.s32.totalorder %v345, 0
        %v348 = vsub.s32 0, %v345
        %v349 = vsel %vm347, %v348, %v345
        %v350 = vshrl.u32 %v349, 4
        %v351 = vand.u32 %v349, 15
        %v352 = vsub.s32 0, %v351
        %v353 = vsel %vm347, %v352, %v351
        %vm354 = vcmp.lt.s32.totalorder %v346, 0
        %v355 = vsub.s32 0, %v346
        %v356 = vsel %vm354, %v355, %v346
        %v357 = vshrl.u32 %v356, 4
        %v358 = vand.u32 %v356, 15
        %v359 = vsub.s32 0, %v358
        %v360 = vsel %vm354, %v359, %v358
        %vm361 = vcmp.ne.s32.totalorder %v353, 0
        %vm362 = vcmp.ne.s32.totalorder %v360, 0
        %vm363 = vcmp.lt.s32.totalorder %v353, 0
        %vm364 = vcmp.lt.s32.totalorder %v360, 0
        %vm365 = vmand %vm363, %vm361
        %vm366 = vmand %vm364, %vm362
        %v367 = vadd.s32 %v353, 16
        %v368 = vadd.s32 %v360, 16
        %v369 = vsel %vm365, %v367, %v353
        %v370 = vsel %vm366, %v368, %v360
        %vm371 = vcmp.ne.s32.totalorder %v369, 0
        %vm372 = vcmp.ne.s32.totalorder %v370, 0
        %vm373 = vcmp.ne.s32.totalorder %v369, 15
        %vm374 = vcmp.ne.s32.totalorder %v370, 15
        %v375 = vld [vmem:[%s298] sm:$0xf]
        %v376 = vld [vmem:[%s298 + $0x4] sm:$0xf]
        %v377 = vunpack.c.l.bf16 %v375
        %v378 = vunpack.c.l.bf16 %v376
        %v379 = vrot.slane %v377, 7
        %v380 = vrot.slane %v378, 7
        %vm381 = vcmp.lt.s32.totalorder %v345, 1
        %v382 = vsel %vm381, %v379, %v380
        %v383 = vsel %vm381, %v380, %v379
        %v384 = vsel %vm371, 1, 0
        %v385 = vsel %vm372, 1, 0
        %vm386 = vcmp.eq.s32.totalorder %v384, 1
        %vm387 = vcmp.eq.s32.totalorder %v385, 1
        %v388 = vsel %vm386, %v383, 0.0
        %v389 = vsel %vm387, %v382, 0.0
        %v390 = vrot.slane %v377, 1
        %v391 = vrot.slane %v378, 1
        %vm392 = vcmp.lt.s32.totalorder %v345, 7
        %v393 = vsel %vm392, %v390, %v391
        %v394 = vsel %vm392, %v391, %v390
        %v395 = vsel %vm373, 1, 0
        %v396 = vsel %vm374, 1, 0
        %vm397 = vcmp.eq.s32.totalorder %v395, 1
        %vm398 = vcmp.eq.s32.totalorder %v396, 1
        %v399 = vsel %vm397, %v393, 0.0
        %v400 = vsel %vm398, %v394, 0.0
        %v401 = vpack.c.bf16 %v389, %v388
        %v402 = vld [vmem:[#allocation5] sm:$0xf]
        %v403 = vld [vmem:[#allocation5 + $0x4] sm:$0xf]
        %v404 = vld [vmem:[#allocation5 + $0x8] sm:$0xf]
        %v405 = vld [vmem:[#allocation5 + $0xc] sm:$0xf]
        %v406 = vld [vmem:[#allocation5 + $0x10] sm:$0xf]
        %v407 = vld [vmem:[#allocation5 + $0x14] sm:$0xf]
        %v408 = vld [vmem:[#allocation5 + $0x18] sm:$0xf]
        %v409 = vld [vmem:[#allocation5 + $0x1c] sm:$0xf]
        %s410 = scalar_lea.vmem [#allocation5], 32
        %v411 = vld [vmem:[%s410] sm:$0xf]
        %v412 = vld [vmem:[%s410 + $0x4] sm:$0xf]
        %v413 = vld [vmem:[%s410 + $0x8] sm:$0xf]
        %v414 = vld [vmem:[%s410 + $0xc] sm:$0xf]
        %v415 = vld [vmem:[%s410 + $0x10] sm:$0xf]
        %v416 = vld [vmem:[%s410 + $0x14] sm:$0xf]
        %v417 = vld [vmem:[%s410 + $0x18] sm:$0xf]
        %v418 = vld [vmem:[%s410 + $0x1c] sm:$0xf]
        %v421 = vunpack.c.l.b16 %v375
        %v422 = vunpack.c.l.b16 %v376
        %v423 = vpack.c.b16 %v422, %v421
        %v432 = vunpack.c.l.b16 %v411
        %v433 = vunpack.c.l.b16 %v412
        %v434 = vunpack.c.l.b16 %v413
        %v435 = vunpack.c.l.b16 %v414
        %v436 = vunpack.c.l.b16 %v415
        %v437 = vunpack.c.l.b16 %v416
        %v438 = vunpack.c.l.b16 %v417
        %v439 = vunpack.c.l.b16 %v418
        %v440 = vpack.c.b16 %v433, %v432
        %v441 = vpack.c.b16 %v435, %v434
        %v442 = vpack.c.b16 %v437, %v436
        %v443 = vpack.c.b16 %v439, %v438
        %vm448 = vcmask 523264
        %v450 = vsel %vm448, %v423, 0
        %452 = vmatprep.subr.bf16.mxu0 0
        %453 = vmatpush1.bf16.msra.mxu0 %v440
        %454 = vmatprep.subr.bf16.mxu0 0
        %455 = vmatpush1.bf16.msra.mxu0 %v441
        %456 = vmatprep.subr.bf16.mxu0 0
        %457 = vmatpush1.bf16.msra.mxu0 %v442
        %458 = vmatprep.subr.bf16.mxu0 0
        %459 = vmatpush1.bf16.msra.mxu0 %v443
        %460 = vmatprep.subr.bf16.mxu0 0
        %461 = vmatpush1.bf16.msra.mxu0 0
        %462 = vmatprep.subr.bf16.mxu0 0
        %463 = vmatpush1.bf16.msra.mxu0 0
        %464 = vmatprep.subr.bf16.mxu0 0
        %465 = vmatpush1.bf16.msra.mxu0 0
        %466 = vmatprep.subr.bf16.mxu0 0
        %467 = vmatpush1.bf16.msra.mxu0 0
        %468 = vmatprep.subr.bf16.mxu0 0
        %469 = vmatpush1.bf16.msra.mxu0 0
        %470 = vmatprep.subr.bf16.mxu0 0
        %471 = vmatpush1.bf16.msra.mxu0 0
        %472 = vmatprep.subr.bf16.mxu0 0
        %473 = vmatpush1.bf16.msra.mxu0 0
        %474 = vmatprep.subr.bf16.mxu0 0
        %475 = vmatpush1.bf16.msra.mxu0 0
        %476 = vmatprep.subr.bf16.mxu0 0
        %477 = vmatpush1.bf16.msra.mxu0 0
        %478 = vmatprep.subr.bf16.mxu0 0
        %479 = vmatpush1.bf16.msra.mxu0 0
        %480 = vmatprep.subr.bf16.mxu0 0
        %481 = vmatpush1.bf16.msra.mxu0 0
        %482 = vmatprep.subr.bf16.mxu0 0
        %483 = vmatpush1.bf16.msra.mxu0 0
        %484 = vmatprep.mubr.bf16.mxu0 0
        %485 = vmatmul.mubr.bf16.gmra.mrb[0].mxu0 %v450
        %v486 = vpop.f32.mrb[0].mxu0
        %v487 = vadd.f32 0.0, %v486
        %v488 = vpop.f32.mrb[0].mxu0
        %v489 = vpop.f32.mrb[0].mxu0
        %v490 = vadd.f32 0.0, %v489
        %v491 = vpop.f32.mrb[0].mxu0
        %492 = vdwg.mxu0
        %v501 = vunpack.c.l.b16 %v402
        %v502 = vunpack.c.l.b16 %v403
        %v503 = vunpack.c.l.b16 %v404
        %v504 = vunpack.c.l.b16 %v405
        %v505 = vunpack.c.l.b16 %v406
        %v506 = vunpack.c.l.b16 %v407
        %v507 = vunpack.c.l.b16 %v408
        %v508 = vunpack.c.l.b16 %v409
        %v509 = vpack.c.b16 %v502, %v501
        %v510 = vpack.c.b16 %v504, %v503
        %v511 = vpack.c.b16 %v506, %v505
        %v512 = vpack.c.b16 %v508, %v507
        %v518 = vsel %vm448, %v401, 0
        %520 = vmatprep.subr.bf16.mxu0 0
        %521 = vmatpush1.bf16.msra.mxu0 %v509
        %522 = vmatprep.subr.bf16.mxu0 0
        %523 = vmatpush1.bf16.msra.mxu0 %v510
        %524 = vmatprep.subr.bf16.mxu0 0
        %525 = vmatpush1.bf16.msra.mxu0 %v511
        %526 = vmatprep.subr.bf16.mxu0 0
        %527 = vmatpush1.bf16.msra.mxu0 %v512
        %528 = vmatprep.subr.bf16.mxu0 0
        %529 = vmatpush1.bf16.msra.mxu0 0
        %530 = vmatprep.subr.bf16.mxu0 0
        %531 = vmatpush1.bf16.msra.mxu0 0
        %532 = vmatprep.subr.bf16.mxu0 0
        %533 = vmatpush1.bf16.msra.mxu0 0
        %534 = vmatprep.subr.bf16.mxu0 0
        %535 = vmatpush1.bf16.msra.mxu0 0
        %536 = vmatprep.subr.bf16.mxu0 0
        %537 = vmatpush1.bf16.msra.mxu0 0
        %538 = vmatprep.subr.bf16.mxu0 0
        %539 = vmatpush1.bf16.msra.mxu0 0
        %540 = vmatprep.subr.bf16.mxu0 0
        %541 = vmatpush1.bf16.msra.mxu0 0
        %542 = vmatprep.subr.bf16.mxu0 0
        %543 = vmatpush1.bf16.msra.mxu0 0
        %544 = vmatprep.subr.bf16.mxu0 0
        %545 = vmatpush1.bf16.msra.mxu0 0
        %546 = vmatprep.subr.bf16.mxu0 0
        %547 = vmatpush1.bf16.msra.mxu0 0
        %548 = vmatprep.subr.bf16.mxu0 0
        %549 = vmatpush1.bf16.msra.mxu0 0
        %550 = vmatprep.subr.bf16.mxu0 0
        %551 = vmatpush1.bf16.msra.mxu0 0
        %552 = vmatprep.mubr.bf16.mxu0 0
        %553 = vmatmul.mubr.bf16.gmra.mrb[0].mxu0 %v518
        %v554 = vpop.f32.mrb[0].mxu0
        %v555 = vadd.f32 %v487, %v554
        %v556 = vpop.f32.mrb[0].mxu0
        %v557 = vpop.f32.mrb[0].mxu0
        %v558 = vadd.f32 %v490, %v557
        %v559 = vpop.f32.mrb[0].mxu0
        %560 = vdwg.mxu0
        %v561 = vpack.c.bf16 %v400, %v399
        %s562 = scalar_lea.vmem [#allocation5], 64
        %v563 = vld [vmem:[%s562] sm:$0xf]
        %v564 = vld [vmem:[%s562 + $0x4] sm:$0xf]
        %v565 = vld [vmem:[%s562 + $0x8] sm:$0xf]
        %v566 = vld [vmem:[%s562 + $0xc] sm:$0xf]
        %v567 = vld [vmem:[%s562 + $0x10] sm:$0xf]
        %v568 = vld [vmem:[%s562 + $0x14] sm:$0xf]
        %v569 = vld [vmem:[%s562 + $0x18] sm:$0xf]
        %v570 = vld [vmem:[%s562 + $0x1c] sm:$0xf]
        %v579 = vunpack.c.l.b16 %v563
        %v580 = vunpack.c.l.b16 %v564
        %v581 = vunpack.c.l.b16 %v565
        %v582 = vunpack.c.l.b16 %v566
        %v583 = vunpack.c.l.b16 %v567
        %v584 = vunpack.c.l.b16 %v568
        %v585 = vunpack.c.l.b16 %v569
        %v586 = vunpack.c.l.b16 %v570
        %v587 = vpack.c.b16 %v580, %v579
        %v588 = vpack.c.b16 %v582, %v581
        %v589 = vpack.c.b16 %v584, %v583
        %v590 = vpack.c.b16 %v586, %v585
        %v596 = vsel %vm448, %v561, 0
        %598 = vmatprep.subr.bf16.mxu0 0
        %599 = vmatpush1.bf16.msra.mxu0 %v587
        %600 = vmatprep.subr.bf16.mxu0 0
        %601 = vmatpush1.bf16.msra.mxu0 %v588
        %602 = vmatprep.subr.bf16.mxu0 0
        %603 = vmatpush1.bf16.msra.mxu0 %v589
        %604 = vmatprep.subr.bf16.mxu0 0
        %605 = vmatpush1.bf16.msra.mxu0 %v590
        %606 = vmatprep.subr.bf16.mxu0 0
        %607 = vmatpush1.bf16.msra.mxu0 0
        %608 = vmatprep.subr.bf16.mxu0 0
        %609 = vmatpush1.bf16.msra.mxu0 0
        %610 = vmatprep.subr.bf16.mxu0 0
        %611 = vmatpush1.bf16.msra.mxu0 0
        %612 = vmatprep.subr.bf16.mxu0 0
        %613 = vmatpush1.bf16.msra.mxu0 0
        %614 = vmatprep.subr.bf16.mxu0 0
        %615 = vmatpush1.bf16.msra.mxu0 0
        %616 = vmatprep.subr.bf16.mxu0 0
        %617 = vmatpush1.bf16.msra.mxu0 0
        %618 = vmatprep.subr.bf16.mxu0 0
        %619 = vmatpush1.bf16.msra.mxu0 0
        %620 = vmatprep.subr.bf16.mxu0 0
        %621 = vmatpush1.bf16.msra.mxu0 0
        %622 = vmatprep.subr.bf16.mxu0 0
        %623 = vmatpush1.bf16.msra.mxu0 0
        %624 = vmatprep.subr.bf16.mxu0 0
        %625 = vmatpush1.bf16.msra.mxu0 0
        %626 = vmatprep.subr.bf16.mxu0 0
        %627 = vmatpush1.bf16.msra.mxu0 0
        %628 = vmatprep.subr.bf16.mxu0 0
        %629 = vmatpush1.bf16.msra.mxu0 0
        %630 = vmatprep.mubr.bf16.mxu0 0
        %631 = vmatmul.mubr.bf16.gmra.mrb[0].mxu0 %v596
        %v632 = vpop.f32.mrb[0].mxu0
        %v633 = vadd.f32 0.0, %v632
        %v634 = vpop.f32.mrb[0].mxu0
        %v635 = vpop.f32.mrb[0].mxu0
        %v636 = vadd.f32 0.0, %v635
        %v637 = vpop.f32.mrb[0].mxu0
        %638 = vdwg.mxu0
        %v639 = vadd.f32 %v555, %v633
        %v640 = vadd.f32 %v558, %v636
        %v641 = vld [vmem:[%s2] sm:$0x1]
        %v643 = vlaneseq
        %v644 = vshrl.u32 %v643, 7
        %v645 = vsub.s32 0, %v644
        %v646 = vrot.slane %v641, %v645
        %v648 = vadd.f32 %v639, %v646
        %v649 = vadd.f32 %v640, %v646
        %v650 = vmax.f32 %v648, 0.0
        %v651 = vmax.f32 %v649, 0.0
        %v652 = vrot.slane %v650, 7
        %v653 = vrot.slane %v651, 7
        %v654 = vsel %vm381, %v652, %v653
        %v655 = vsel %vm381, %v653, %v652
        %v656 = vsel %vm386, %v655, 0.0
        %v657 = vsel %vm387, %v654, 0.0
        %v658 = vrot.slane %v650, 1
        %v659 = vrot.slane %v651, 1
        %v660 = vsel %vm392, %v658, %v659
        %v661 = vsel %vm392, %v659, %v658
        %v662 = vsel %vm397, %v660, 0.0
        %v663 = vsel %vm398, %v661, 0.0
        %v664 = vpack.c.bf16 %v657, %v656
        %v665 = vld [vmem:[#allocation7] sm:$0xf]
        %v666 = vld [vmem:[#allocation7 + $0x4] sm:$0xf]
        %v667 = vld [vmem:[#allocation7 + $0x8] sm:$0xf]
        %v668 = vld [vmem:[#allocation7 + $0xc] sm:$0xf]
        %v669 = vld [vmem:[#allocation7 + $0x10] sm:$0xf]
        %v670 = vld [vmem:[#allocation7 + $0x14] sm:$0xf]
        %v671 = vld [vmem:[#allocation7 + $0x18] sm:$0xf]
        %v672 = vld [vmem:[#allocation7 + $0x1c] sm:$0xf]
        %v673 = vld [vmem:[#allocation7 + $0x20] sm:$0xf]
        %v674 = vld [vmem:[#allocation7 + $0x24] sm:$0xf]
        %v675 = vld [vmem:[#allocation7 + $0x28] sm:$0xf]
        %v676 = vld [vmem:[#allocation7 + $0x2c] sm:$0xf]
        %v677 = vld [vmem:[#allocation7 + $0x30] sm:$0xf]
        %v678 = vld [vmem:[#allocation7 + $0x34] sm:$0xf]
        %v679 = vld [vmem:[#allocation7 + $0x38] sm:$0xf]
        %v680 = vld [vmem:[#allocation7 + $0x3c] sm:$0xf]
        %v681 = vpack.c.bf16 %v651, %v650
        %s682 = scalar_lea.vmem [#allocation7], 64
        %v683 = vld [vmem:[%s682] sm:$0xf]
        %v684 = vld [vmem:[%s682 + $0x4] sm:$0xf]
        %v685 = vld [vmem:[%s682 + $0x8] sm:$0xf]
        %v686 = vld [vmem:[%s682 + $0xc] sm:$0xf]
        %v687 = vld [vmem:[%s682 + $0x10] sm:$0xf]
        %v688 = vld [vmem:[%s682 + $0x14] sm:$0xf]
        %v689 = vld [vmem:[%s682 + $0x18] sm:$0xf]
        %v690 = vld [vmem:[%s682 + $0x1c] sm:$0xf]
        %v691 = vld [vmem:[%s682 + $0x20] sm:$0xf]
        %v692 = vld [vmem:[%s682 + $0x24] sm:$0xf]
        %v693 = vld [vmem:[%s682 + $0x28] sm:$0xf]
        %v694 = vld [vmem:[%s682 + $0x2c] sm:$0xf]
        %v695 = vld [vmem:[%s682 + $0x30] sm:$0xf]
        %v696 = vld [vmem:[%s682 + $0x34] sm:$0xf]
        %v697 = vld [vmem:[%s682 + $0x38] sm:$0xf]
        %v698 = vld [vmem:[%s682 + $0x3c] sm:$0xf]
        %v715 = vunpack.c.l.b16 %v683
        %v716 = vunpack.c.l.b16 %v684
        %v717 = vunpack.c.l.b16 %v685
        %v718 = vunpack.c.l.b16 %v686
        %v719 = vunpack.c.l.b16 %v687
        %v720 = vunpack.c.l.b16 %v688
        %v721 = vunpack.c.l.b16 %v689
        %v722 = vunpack.c.l.b16 %v690
        %v723 = vunpack.c.l.b16 %v691
        %v724 = vunpack.c.l.b16 %v692
        %v725 = vunpack.c.l.b16 %v693
        %v726 = vunpack.c.l.b16 %v694
        %v727 = vunpack.c.l.b16 %v695
        %v728 = vunpack.c.l.b16 %v696
        %v729 = vunpack.c.l.b16 %v697
        %v730 = vunpack.c.l.b16 %v698
        %v731 = vpack.c.b16 %v716, %v715
        %v732 = vpack.c.b16 %v718, %v717
        %v733 = vpack.c.b16 %v720, %v719
        %v734 = vpack.c.b16 %v722, %v721
        %v735 = vpack.c.b16 %v724, %v723
        %v736 = vpack.c.b16 %v726, %v725
        %v737 = vpack.c.b16 %v728, %v727
        %v738 = vpack.c.b16 %v730, %v729
        %747 = vmatprep.subr.bf16.mxu0 0
        %748 = vmatpush1.bf16.msra.mxu0 %v731
        %749 = vmatprep.subr.bf16.mxu0 0
        %750 = vmatpush1.bf16.msra.mxu0 %v732
        %751 = vmatprep.subr.bf16.mxu0 0
        %752 = vmatpush1.bf16.msra.mxu0 %v733
        %753 = vmatprep.subr.bf16.mxu0 0
        %754 = vmatpush1.bf16.msra.mxu0 %v734
        %755 = vmatprep.subr.bf16.mxu0 0
        %756 = vmatpush1.bf16.msra.mxu0 %v735
        %757 = vmatprep.subr.bf16.mxu0 0
        %758 = vmatpush1.bf16.msra.mxu0 %v736
        %759 = vmatprep.subr.bf16.mxu0 0
        %760 = vmatpush1.bf16.msra.mxu0 %v737
        %761 = vmatprep.subr.bf16.mxu0 0
        %762 = vmatpush1.bf16.msra.mxu0 %v738
        %763 = vmatprep.subr.bf16.mxu0 0
        %764 = vmatpush1.bf16.msra.mxu0 0
        %765 = vmatprep.subr.bf16.mxu0 0
        %766 = vmatpush1.bf16.msra.mxu0 0
        %767 = vmatprep.subr.bf16.mxu0 0
        %768 = vmatpush1.bf16.msra.mxu0 0
        %769 = vmatprep.subr.bf16.mxu0 0
        %770 = vmatpush1.bf16.msra.mxu0 0
        %771 = vmatprep.subr.bf16.mxu0 0
        %772 = vmatpush1.bf16.msra.mxu0 0
        %773 = vmatprep.subr.bf16.mxu0 0
        %774 = vmatpush1.bf16.msra.mxu0 0
        %775 = vmatprep.subr.bf16.mxu0 0
        %776 = vmatpush1.bf16.msra.mxu0 0
        %777 = vmatprep.subr.bf16.mxu0 0
        %778 = vmatpush1.bf16.msra.mxu0 0
        %779 = vmatprep.mubr.bf16.mxu0 0
        %780 = vmatmul.mubr.bf16.gmra.mrb[0].mxu0 %v681
        %v781 = vpop.f32.mrb[0].mxu0
        %v782 = vadd.f32 0.0, %v781
        %v783 = vpop.f32.mrb[0].mxu0
        %v784 = vpop.f32.mrb[0].mxu0
        %v785 = vadd.f32 0.0, %v784
        %v786 = vpop.f32.mrb[0].mxu0
        %787 = vdwg.mxu0
        %v804 = vunpack.c.l.b16 %v665
        %v805 = vunpack.c.l.b16 %v666
        %v806 = vunpack.c.l.b16 %v667
        %v807 = vunpack.c.l.b16 %v668
        %v808 = vunpack.c.l.b16 %v669
        %v809 = vunpack.c.l.b16 %v670
        %v810 = vunpack.c.l.b16 %v671
        %v811 = vunpack.c.l.b16 %v672
        %v812 = vunpack.c.l.b16 %v673
        %v813 = vunpack.c.l.b16 %v674
        %v814 = vunpack.c.l.b16 %v675
        %v815 = vunpack.c.l.b16 %v676
        %v816 = vunpack.c.l.b16 %v677
        %v817 = vunpack.c.l.b16 %v678
        %v818 = vunpack.c.l.b16 %v679
        %v819 = vunpack.c.l.b16 %v680
        %v820 = vpack.c.b16 %v805, %v804
        %v821 = vpack.c.b16 %v807, %v806
        %v822 = vpack.c.b16 %v809, %v808
        %v823 = vpack.c.b16 %v811, %v810
        %v824 = vpack.c.b16 %v813, %v812
        %v825 = vpack.c.b16 %v815, %v814
        %v826 = vpack.c.b16 %v817, %v816
        %v827 = vpack.c.b16 %v819, %v818
        %836 = vmatprep.subr.bf16.mxu0 0
        %837 = vmatpush1.bf16.msra.mxu0 %v820
        %838 = vmatprep.subr.bf16.mxu0 0
        %839 = vmatpush1.bf16.msra.mxu0 %v821
        %840 = vmatprep.subr.bf16.mxu0 0
        %841 = vmatpush1.bf16.msra.mxu0 %v822
        %842 = vmatprep.subr.bf16.mxu0 0
        %843 = vmatpush1.bf16.msra.mxu0 %v823
        %844 = vmatprep.subr.bf16.mxu0 0
        %845 = vmatpush1.bf16.msra.mxu0 %v824
        %846 = vmatprep.subr.bf16.mxu0 0
        %847 = vmatpush1.bf16.msra.mxu0 %v825
        %848 = vmatprep.subr.bf16.mxu0 0
        %849 = vmatpush1.bf16.msra.mxu0 %v826
        %850 = vmatprep.subr.bf16.mxu0 0
        %851 = vmatpush1.bf16.msra.mxu0 %v827
        %852 = vmatprep.subr.bf16.mxu0 0
        %853 = vmatpush1.bf16.msra.mxu0 0
        %854 = vmatprep.subr.bf16.mxu0 0
        %855 = vmatpush1.bf16.msra.mxu0 0
        %856 = vmatprep.subr.bf16.mxu0 0
        %857 = vmatpush1.bf16.msra.mxu0 0
        %858 = vmatprep.subr.bf16.mxu0 0
        %859 = vmatpush1.bf16.msra.mxu0 0
        %860 = vmatprep.subr.bf16.mxu0 0
        %861 = vmatpush1.bf16.msra.mxu0 0
        %862 = vmatprep.subr.bf16.mxu0 0
        %863 = vmatpush1.bf16.msra.mxu0 0
        %864 = vmatprep.subr.bf16.mxu0 0
        %865 = vmatpush1.bf16.msra.mxu0 0
        %866 = vmatprep.subr.bf16.mxu0 0
        %867 = vmatpush1.bf16.msra.mxu0 0
        %868 = vmatprep.mubr.bf16.mxu0 0
        %869 = vmatmul.mubr.bf16.gmra.mrb[0].mxu0 %v664
        %v870 = vpop.f32.mrb[0].mxu0
        %v871 = vadd.f32 %v782, %v870
        %v872 = vpop.f32.mrb[0].mxu0
        %v873 = vpop.f32.mrb[0].mxu0
        %v874 = vadd.f32 %v785, %v873
        %v875 = vpop.f32.mrb[0].mxu0
        %876 = vdwg.mxu0
        %v877 = vpack.c.bf16 %v663, %v662
        %s878 = scalar_lea.vmem [#allocation7], 128
        %v879 = vld [vmem:[%s878] sm:$0xf]
        %v880 = vld [vmem:[%s878 + $0x4] sm:$0xf]
        %v881 = vld [vmem:[%s878 + $0x8] sm:$0xf]
        %v882 = vld [vmem:[%s878 + $0xc] sm:$0xf]
        %v883 = vld [vmem:[%s878 + $0x10] sm:$0xf]
        %v884 = vld [vmem:[%s878 + $0x14] sm:$0xf]
        %v885 = vld [vmem:[%s878 + $0x18] sm:$0xf]
        %v886 = vld [vmem:[%s878 + $0x1c] sm:$0xf]
        %v887 = vld [vmem:[%s878 + $0x20] sm:$0xf]
        %v888 = vld [vmem:[%s878 + $0x24] sm:$0xf]
        %v889 = vld [vmem:[%s878 + $0x28] sm:$0xf]
        %v890 = vld [vmem:[%s878 + $0x2c] sm:$0xf]
        %v891 = vld [vmem:[%s878 + $0x30] sm:$0xf]
        %v892 = vld [vmem:[%s878 + $0x34] sm:$0xf]
        %v893 = vld [vmem:[%s878 + $0x38] sm:$0xf]
        %v894 = vld [vmem:[%s878 + $0x3c] sm:$0xf]
        %v911 = vunpack.c.l.b16 %v879
        %v912 = vunpack.c.l.b16 %v880
        %v913 = vunpack.c.l.b16 %v881
        %v914 = vunpack.c.l.b16 %v882
        %v915 = vunpack.c.l.b16 %v883
        %v916 = vunpack.c.l.b16 %v884
        %v917 = vunpack.c.l.b16 %v885
        %v918 = vunpack.c.l.b16 %v886
        %v919 = vunpack.c.l.b16 %v887
        %v920 = vunpack.c.l.b16 %v888
        %v921 = vunpack.c.l.b16 %v889
        %v922 = vunpack.c.l.b16 %v890
        %v923 = vunpack.c.l.b16 %v891
        %v924 = vunpack.c.l.b16 %v892
        %v925 = vunpack.c.l.b16 %v893
        %v926 = vunpack.c.l.b16 %v894
        %v927 = vpack.c.b16 %v912, %v911
        %v928 = vpack.c.b16 %v914, %v913
        %v929 = vpack.c.b16 %v916, %v915
        %v930 = vpack.c.b16 %v918, %v917
        %v931 = vpack.c.b16 %v920, %v919
        %v932 = vpack.c.b16 %v922, %v921
        %v933 = vpack.c.b16 %v924, %v923
        %v934 = vpack.c.b16 %v926, %v925
        %943 = vmatprep.subr.bf16.mxu0 0
        %944 = vmatpush1.bf16.msra.mxu0 %v927
        %945 = vmatprep.subr.bf16.mxu0 0
        %946 = vmatpush1.bf16.msra.mxu0 %v928
        %947 = vmatprep.subr.bf16.mxu0 0
        %948 = vmatpush1.bf16.msra.mxu0 %v929
        %949 = vmatprep.subr.bf16.mxu0 0
        %950 = vmatpush1.bf16.msra.mxu0 %v930
        %951 = vmatprep.subr.bf16.mxu0 0
        %952 = vmatpush1.bf16.msra.mxu0 %v931
        %953 = vmatprep.subr.bf16.mxu0 0
        %954 = vmatpush1.bf16.msra.mxu0 %v932
        %955 = vmatprep.subr.bf16.mxu0 0
        %956 = vmatpush1.bf16.msra.mxu0 %v933
        %957 = vmatprep.subr.bf16.mxu0 0
        %958 = vmatpush1.bf16.msra.mxu0 %v934
        %959 = vmatprep.subr.bf16.mxu0 0
        %960 = vmatpush1.bf16.msra.mxu0 0
        %961 = vmatprep.subr.bf16.mxu0 0
        %962 = vmatpush1.bf16.msra.mxu0 0
        %963 = vmatprep.subr.bf16.mxu0 0
        %964 = vmatpush1.bf16.msra.mxu0 0
        %965 = vmatprep.subr.bf16.mxu0 0
        %966 = vmatpush1.bf16.msra.mxu0 0
        %967 = vmatprep.subr.bf16.mxu0 0
        %968 = vmatpush1.bf16.msra.mxu0 0
        %969 = vmatprep.subr.bf16.mxu0 0
        %970 = vmatpush1.bf16.msra.mxu0 0
        %971 = vmatprep.subr.bf16.mxu0 0
        %972 = vmatpush1.bf16.msra.mxu0 0
        %973 = vmatprep.subr.bf16.mxu0 0
        %974 = vmatpush1.bf16.msra.mxu0 0
        %975 = vmatprep.mubr.bf16.mxu0 0
        %976 = vmatmul.mubr.bf16.gmra.mrb[0].mxu0 %v877
        %v977 = vpop.f32.mrb[0].mxu0
        %v978 = vadd.f32 0.0, %v977
        %v979 = vpop.f32.mrb[0].mxu0
        %v980 = vpop.f32.mrb[0].mxu0
        %v981 = vadd.f32 0.0, %v980
        %v982 = vpop.f32.mrb[0].mxu0
        %983 = vdwg.mxu0
        %v984 = vadd.f32 %v871, %v978
        %v985 = vadd.f32 %v874, %v981
        %v986 = vld [vmem:[%s4] sm:$0x1]
        %v988 = vlaneseq
        %v989 = vshrl.u32 %v988, 7
        %v990 = vsub.s32 0, %v989
        %v991 = vrot.slane %v986, %v990
        %v993 = vadd.f32 %v984, %v991
        %v994 = vadd.f32 %v985, %v991
        %v995 = vmax.f32 %v993, 0.0
        %v996 = vmax.f32 %v994, 0.0
        %v997 = vrot.slane %v995, 7
        %v998 = vrot.slane %v996, 7
        %v999 = vsel %vm381, %v997, %v998
        %v1000 = vsel %vm381, %v998, %v997
        %v1001 = vsel %vm386, %v1000, 0.0
        %v1002 = vsel %vm387, %v999, 0.0
        %v1003 = vrot.slane %v995, 1
        %v1004 = vrot.slane %v996, 1
        %v1005 = vsel %vm392, %v1003, %v1004
        %v1006 = vsel %vm392, %v1004, %v1003
        %v1007 = vsel %vm397, %v1005, 0.0
        %v1008 = vsel %vm398, %v1006, 0.0
        %v1009 = vpack.c.bf16 %v1002, %v1001
        %v1010 = vld [vmem:[#allocation8] sm:$0xf]
        %v1011 = vld [vmem:[#allocation8 + $0x4] sm:$0xf]
        %v1012 = vld [vmem:[#allocation8 + $0x8] sm:$0xf]
        %v1013 = vld [vmem:[#allocation8 + $0xc] sm:$0xf]
        %v1014 = vld [vmem:[#allocation8 + $0x10] sm:$0xf]
        %v1015 = vld [vmem:[#allocation8 + $0x14] sm:$0xf]
        %v1016 = vld [vmem:[#allocation8 + $0x18] sm:$0xf]
        %v1017 = vld [vmem:[#allocation8 + $0x1c] sm:$0xf]
        %v1018 = vld [vmem:[#allocation8 + $0x20] sm:$0xf]
        %v1019 = vld [vmem:[#allocation8 + $0x24] sm:$0xf]
        %v1020 = vld [vmem:[#allocation8 + $0x28] sm:$0xf]
        %v1021 = vld [vmem:[#allocation8 + $0x2c] sm:$0xf]
        %v1022 = vld [vmem:[#allocation8 + $0x30] sm:$0xf]
        %v1023 = vld [vmem:[#allocation8 + $0x34] sm:$0xf]
        %v1024 = vld [vmem:[#allocation8 + $0x38] sm:$0xf]
        %v1025 = vld [vmem:[#allocation8 + $0x3c] sm:$0xf]
        %v1026 = vpack.c.bf16 %v996, %v995
        %s1027 = scalar_lea.vmem [#allocation8], 64
        %v1028 = vld [vmem:[%s1027] sm:$0xf]
        %v1029 = vld [vmem:[%s1027 + $0x4] sm:$0xf]
        %v1030 = vld [vmem:[%s1027 + $0x8] sm:$0xf]
        %v1031 = vld [vmem:[%s1027 + $0xc] sm:$0xf]
        %v1032 = vld [vmem:[%s1027 + $0x10] sm:$0xf]
        %v1033 = vld [vmem:[%s1027 + $0x14] sm:$0xf]
        %v1034 = vld [vmem:[%s1027 + $0x18] sm:$0xf]
        %v1035 = vld [vmem:[%s1027 + $0x1c] sm:$0xf]
        %v1036 = vld [vmem:[%s1027 + $0x20] sm:$0xf]
        %v1037 = vld [vmem:[%s1027 + $0x24] sm:$0xf]
        %v1038 = vld [vmem:[%s1027 + $0x28] sm:$0xf]
        %v1039 = vld [vmem:[%s1027 + $0x2c] sm:$0xf]
        %v1040 = vld [vmem:[%s1027 + $0x30] sm:$0xf]
        %v1041 = vld [vmem:[%s1027 + $0x34] sm:$0xf]
        %v1042 = vld [vmem:[%s1027 + $0x38] sm:$0xf]
        %v1043 = vld [vmem:[%s1027 + $0x3c] sm:$0xf]
        %v1060 = vunpack.c.l.b16 %v1028
        %v1061 = vunpack.c.l.b16 %v1029
        %v1062 = vunpack.c.l.b16 %v1030
        %v1063 = vunpack.c.l.b16 %v1031
        %v1064 = vunpack.c.l.b16 %v1032
        %v1065 = vunpack.c.l.b16 %v1033
        %v1066 = vunpack.c.l.b16 %v1034
        %v1067 = vunpack.c.l.b16 %v1035
        %v1068 = vunpack.c.l.b16 %v1036
        %v1069 = vunpack.c.l.b16 %v1037
        %v1070 = vunpack.c.l.b16 %v1038
        %v1071 = vunpack.c.l.b16 %v1039
        %v1072 = vunpack.c.l.b16 %v1040
        %v1073 = vunpack.c.l.b16 %v1041
        %v1074 = vunpack.c.l.b16 %v1042
        %v1075 = vunpack.c.l.b16 %v1043
        %v1076 = vpack.c.b16 %v1061, %v1060
        %v1077 = vpack.c.b16 %v1063, %v1062
        %v1078 = vpack.c.b16 %v1065, %v1064
        %v1079 = vpack.c.b16 %v1067, %v1066
        %v1080 = vpack.c.b16 %v1069, %v1068
        %v1081 = vpack.c.b16 %v1071, %v1070
        %v1082 = vpack.c.b16 %v1073, %v1072
        %v1083 = vpack.c.b16 %v1075, %v1074
        %1092 = vmatprep.subr.bf16.mxu0 0
        %1093 = vmatpush1.bf16.msra.mxu0 %v1076
        %1094 = vmatprep.subr.bf16.mxu0 0
        %1095 = vmatpush1.bf16.msra.mxu0 %v1077
        %1096 = vmatprep.subr.bf16.mxu0 0
        %1097 = vmatpush1.bf16.msra.mxu0 %v1078
        %1098 = vmatprep.subr.bf16.mxu0 0
        %1099 = vmatpush1.bf16.msra.mxu0 %v1079
        %1100 = vmatprep.subr.bf16.mxu0 0
        %1101 = vmatpush1.bf16.msra.mxu0 %v1080
        %1102 = vmatprep.subr.bf16.mxu0 0
        %1103 = vmatpush1.bf16.msra.mxu0 %v1081
        %1104 = vmatprep.subr.bf16.mxu0 0
        %1105 = vmatpush1.bf16.msra.mxu0 %v1082
        %1106 = vmatprep.subr.bf16.mxu0 0
        %1107 = vmatpush1.bf16.msra.mxu0 %v1083
        %1108 = vmatprep.subr.bf16.mxu0 0
        %1109 = vmatpush1.bf16.msra.mxu0 0
        %1110 = vmatprep.subr.bf16.mxu0 0
        %1111 = vmatpush1.bf16.msra.mxu0 0
        %1112 = vmatprep.subr.bf16.mxu0 0
        %1113 = vmatpush1.bf16.msra.mxu0 0
        %1114 = vmatprep.subr.bf16.mxu0 0
        %1115 = vmatpush1.bf16.msra.mxu0 0
        %1116 = vmatprep.subr.bf16.mxu0 0
        %1117 = vmatpush1.bf16.msra.mxu0 0
        %1118 = vmatprep.subr.bf16.mxu0 0
        %1119 = vmatpush1.bf16.msra.mxu0 0
        %1120 = vmatprep.subr.bf16.mxu0 0
        %1121 = vmatpush1.bf16.msra.mxu0 0
        %1122 = vmatprep.subr.bf16.mxu0 0
        %1123 = vmatpush1.bf16.msra.mxu0 0
        %1124 = vmatprep.mubr.bf16.mxu0 0
        %1125 = vmatmul.mubr.bf16.gmra.mrb[0].mxu0 %v1026
        %v1126 = vpop.f32.mrb[0].mxu0
        %v1127 = vadd.f32 0.0, %v1126
        %v1128 = vpop.f32.mrb[0].mxu0
        %v1129 = vpop.f32.mrb[0].mxu0
        %v1130 = vadd.f32 0.0, %v1129
        %v1131 = vpop.f32.mrb[0].mxu0
        %1132 = vdwg.mxu0
        %v1149 = vunpack.c.l.b16 %v1010
        %v1150 = vunpack.c.l.b16 %v1011
        %v1151 = vunpack.c.l.b16 %v1012
        %v1152 = vunpack.c.l.b16 %v1013
        %v1153 = vunpack.c.l.b16 %v1014
        %v1154 = vunpack.c.l.b16 %v1015
        %v1155 = vunpack.c.l.b16 %v1016
        %v1156 = vunpack.c.l.b16 %v1017
        %v1157 = vunpack.c.l.b16 %v1018
        %v1158 = vunpack.c.l.b16 %v1019
        %v1159 = vunpack.c.l.b16 %v1020
        %v1160 = vunpack.c.l.b16 %v1021
        %v1161 = vunpack.c.l.b16 %v1022
        %v1162 = vunpack.c.l.b16 %v1023
        %v1163 = vunpack.c.l.b16 %v1024
        %v1164 = vunpack.c.l.b16 %v1025
        %v1165 = vpack.c.b16 %v1150, %v1149
        %v1166 = vpack.c.b16 %v1152, %v1151
        %v1167 = vpack.c.b16 %v1154, %v1153
        %v1168 = vpack.c.b16 %v1156, %v1155
        %v1169 = vpack.c.b16 %v1158, %v1157
        %v1170 = vpack.c.b16 %v1160, %v1159
        %v1171 = vpack.c.b16 %v1162, %v1161
        %v1172 = vpack.c.b16 %v1164, %v1163
        %1181 = vmatprep.subr.bf16.mxu0 0
        %1182 = vmatpush1.bf16.msra.mxu0 %v1165
        %1183 = vmatprep.subr.bf16.mxu0 0
        %1184 = vmatpush1.bf16.msra.mxu0 %v1166
        %1185 = vmatprep.subr.bf16.mxu0 0
        %1186 = vmatpush1.bf16.msra.mxu0 %v1167
        %1187 = vmatprep.subr.bf16.mxu0 0
        %1188 = vmatpush1.bf16.msra.mxu0 %v1168
        %1189 = vmatprep.subr.bf16.mxu0 0
        %1190 = vmatpush1.bf16.msra.mxu0 %v1169
        %1191 = vmatprep.subr.bf16.mxu0 0
        %1192 = vmatpush1.bf16.msra.mxu0 %v1170
        %1193 = vmatprep.subr.bf16.mxu0 0
        %1194 = vmatpush1.bf16.msra.mxu0 %v1171
        %1195 = vmatprep.subr.bf16.mxu0 0
        %1196 = vmatpush1.bf16.msra.mxu0 %v1172
        %1197 = vmatprep.subr.bf16.mxu0 0
        %1198 = vmatpush1.bf16.msra.mxu0 0
        %1199 = vmatprep.subr.bf16.mxu0 0
        %1200 = vmatpush1.bf16.msra.mxu0 0
        %1201 = vmatprep.subr.bf16.mxu0 0
        %1202 = vmatpush1.bf16.msra.mxu0 0
        %1203 = vmatprep.subr.bf16.mxu0 0
        %1204 = vmatpush1.bf16.msra.mxu0 0
        %1205 = vmatprep.subr.bf16.mxu0 0
        %1206 = vmatpush1.bf16.msra.mxu0 0
        %1207 = vmatprep.subr.bf16.mxu0 0
        %1208 = vmatpush1.bf16.msra.mxu0 0
        %1209 = vmatprep.subr.bf16.mxu0 0
        %1210 = vmatpush1.bf16.msra.mxu0 0
        %1211 = vmatprep.subr.bf16.mxu0 0
        %1212 = vmatpush1.bf16.msra.mxu0 0
        %1213 = vmatprep.mubr.bf16.mxu0 0
        %1214 = vmatmul.mubr.bf16.gmra.mrb[0].mxu0 %v1009
        %v1215 = vpop.f32.mrb[0].mxu0
        %v1216 = vadd.f32 %v1127, %v1215
        %v1217 = vpop.f32.mrb[0].mxu0
        %v1218 = vpop.f32.mrb[0].mxu0
        %v1219 = vadd.f32 %v1130, %v1218
        %v1220 = vpop.f32.mrb[0].mxu0
        %1221 = vdwg.mxu0
        %v1222 = vpack.c.bf16 %v1008, %v1007
        %s1223 = scalar_lea.vmem [#allocation8], 128
        %v1224 = vld [vmem:[%s1223] sm:$0xf]
        %v1225 = vld [vmem:[%s1223 + $0x4] sm:$0xf]
        %v1226 = vld [vmem:[%s1223 + $0x8] sm:$0xf]
        %v1227 = vld [vmem:[%s1223 + $0xc] sm:$0xf]
        %v1228 = vld [vmem:[%s1223 + $0x10] sm:$0xf]
        %v1229 = vld [vmem:[%s1223 + $0x14] sm:$0xf]
        %v1230 = vld [vmem:[%s1223 + $0x18] sm:$0xf]
        %v1231 = vld [vmem:[%s1223 + $0x1c] sm:$0xf]
        %v1232 = vld [vmem:[%s1223 + $0x20] sm:$0xf]
        %v1233 = vld [vmem:[%s1223 + $0x24] sm:$0xf]
        %v1234 = vld [vmem:[%s1223 + $0x28] sm:$0xf]
        %v1235 = vld [vmem:[%s1223 + $0x2c] sm:$0xf]
        %v1236 = vld [vmem:[%s1223 + $0x30] sm:$0xf]
        %v1237 = vld [vmem:[%s1223 + $0x34] sm:$0xf]
        %v1238 = vld [vmem:[%s1223 + $0x38] sm:$0xf]
        %v1239 = vld [vmem:[%s1223 + $0x3c] sm:$0xf]
        %v1256 = vunpack.c.l.b16 %v1224
        %v1257 = vunpack.c.l.b16 %v1225
        %v1258 = vunpack.c.l.b16 %v1226
        %v1259 = vunpack.c.l.b16 %v1227
        %v1260 = vunpack.c.l.b16 %v1228
        %v1261 = vunpack.c.l.b16 %v1229
        %v1262 = vunpack.c.l.b16 %v1230
        %v1263 = vunpack.c.l.b16 %v1231
        %v1264 = vunpack.c.l.b16 %v1232
        %v1265 = vunpack.c.l.b16 %v1233
        %v1266 = vunpack.c.l.b16 %v1234
        %v1267 = vunpack.c.l.b16 %v1235
        %v1268 = vunpack.c.l.b16 %v1236
        %v1269 = vunpack.c.l.b16 %v1237
        %v1270 = vunpack.c.l.b16 %v1238
        %v1271 = vunpack.c.l.b16 %v1239
        %v1272 = vpack.c.b16 %v1257, %v1256
        %v1273 = vpack.c.b16 %v1259, %v1258
        %v1274 = vpack.c.b16 %v1261, %v1260
        %v1275 = vpack.c.b16 %v1263, %v1262
        %v1276 = vpack.c.b16 %v1265, %v1264
        %v1277 = vpack.c.b16 %v1267, %v1266
        %v1278 = vpack.c.b16 %v1269, %v1268
        %v1279 = vpack.c.b16 %v1271, %v1270
        %1288 = vmatprep.subr.bf16.mxu0 0
        %1289 = vmatpush1.bf16.msra.mxu0 %v1272
        %1290 = vmatprep.subr.bf16.mxu0 0
        %1291 = vmatpush1.bf16.msra.mxu0 %v1273
        %1292 = vmatprep.subr.bf16.mxu0 0
        %1293 = vmatpush1.bf16.msra.mxu0 %v1274
        %1294 = vmatprep.subr.bf16.mxu0 0
        %1295 = vmatpush1.bf16.msra.mxu0 %v1275
        %1296 = vmatprep.subr.bf16.mxu0 0
        %1297 = vmatpush1.bf16.msra.mxu0 %v1276
        %1298 = vmatprep.subr.bf16.mxu0 0
        %1299 = vmatpush1.bf16.msra.mxu0 %v1277
        %1300 = vmatprep.subr.bf16.mxu0 0
        %1301 = vmatpush1.bf16.msra.mxu0 %v1278
        %1302 = vmatprep.subr.bf16.mxu0 0
        %1303 = vmatpush1.bf16.msra.mxu0 %v1279
        %1304 = vmatprep.subr.bf16.mxu0 0
        %1305 = vmatpush1.bf16.msra.mxu0 0
        %1306 = vmatprep.subr.bf16.mxu0 0
        %1307 = vmatpush1.bf16.msra.mxu0 0
        %1308 = vmatprep.subr.bf16.mxu0 0
        %1309 = vmatpush1.bf16.msra.mxu0 0
        %1310 = vmatprep.subr.bf16.mxu0 0
        %1311 = vmatpush1.bf16.msra.mxu0 0
        %1312 = vmatprep.subr.bf16.mxu0 0
        %1313 = vmatpush1.bf16.msra.mxu0 0
        %1314 = vmatprep.subr.bf16.mxu0 0
        %1315 = vmatpush1.bf16.msra.mxu0 0
        %1316 = vmatprep.subr.bf16.mxu0 0
        %1317 = vmatpush1.bf16.msra.mxu0 0
        %1318 = vmatprep.subr.bf16.mxu0 0
        %1319 = vmatpush1.bf16.msra.mxu0 0
        %1320 = vmatprep.mubr.bf16.mxu0 0
        %1321 = vmatmul.mubr.bf16.gmra.mrb[0].mxu0 %v1222
        %v1322 = vpop.f32.mrb[0].mxu0
        %v1323 = vadd.f32 0.0, %v1322
        %v1324 = vpop.f32.mrb[0].mxu0
        %v1325 = vpop.f32.mrb[0].mxu0
        %v1326 = vadd.f32 0.0, %v1325
        %v1327 = vpop.f32.mrb[0].mxu0
        %1328 = vdwg.mxu0
        %v1329 = vadd.f32 %v1216, %v1323
        %v1330 = vadd.f32 %v1219, %v1326
        %v1331 = vld [vmem:[%s6] sm:$0x1]
        %v1333 = vlaneseq
        %v1334 = vshrl.u32 %v1333, 7
        %v1335 = vsub.s32 0, %v1334
        %v1336 = vrot.slane %v1331, %v1335
        %v1338 = vadd.f32 %v1329, %v1336
        %v1339 = vadd.f32 %v1330, %v1336
        %1340 = vst [vmem:[%s340] sm:$0xff] %v1338
        %1341 = vst [vmem:[%s340 + $0x8] sm:$0xff] %v1339
        %s1342 = sand.u32 %s186, 1
        %s1343 = scalar_lea.sflag [#allocation4], %s1342
        %s1344 = sand.u32 %s186, 1
        %s1345 = smul.addr %s1344, 16
        %s1346 = scalar_lea.vmem [#allocation10], %s1345
        // Predicated region
        $region65: #{tpu_custom_call.1} parent=47 // pred_check
          %p1347 = pneg %p196
        $region66: #{tpu_custom_call.1} parent=47 // pred_check_branch
          %1349 = sbr.rel (%p1347) target = $region68
        $region67: #{tpu_custom_call.1} parent=47 // pred_region
          %s1350 = smul.u32 2, %s26
          %s1352 = ssub.s32 256, 256
          %1353 = vsyncadd %s1343, %s1352
          %s1354 = smul.addr %s1350, 128
          %s1355 = scalar_lea.hbm %s7, %s1354
          %s1356 = sshll.u32 %s1346, 4
          %s1357 = int_to_ptr.vmem [resolvable:$true] %s1356
          %1362 = dma.vmem_to_hbm [thread:$0]  %s1357, 256, %s1355, %s1343, 128, 128, 8
        $region68: #{tpu_custom_call.1} parent=47 // pred_fallthru
          _
      $region48: #{tpu_custom_call.1} parent=5 // pred_fallthru
        _
      %p1363 = scmp.le.s32.totalorder 2, %s21
      // Predicated region
      $region69: #{tpu_custom_call.1} parent=5 // pred_check
        %p1364 = pneg %p1363
      $region70: #{tpu_custom_call.1} parent=5 // pred_check_branch
        %1366 = sbr.rel (%p1364) target = $region72
      $region71: #{tpu_custom_call.1} parent=5 // pred_region
        %s1367 = ssub.s32 %s21, 2
        // Predicated region
        $region73: #{tpu_custom_call.1} parent=71 // pred_check
          %p1368 = pneg %p202
        $region74: #{tpu_custom_call.1} parent=71 // pred_check_branch
          %1370 = sbr.rel (%p1368) target = $region76
        $region75: #{tpu_custom_call.1} parent=71 // pred_region
          %s1371 = sand.u32 %s187, 1
          %s1372 = scalar_lea.sflag [#allocation4], %s1371
          %s1373 = sand.u32 %s187, 1
          %s1374 = smul.addr %s1373, 16
          %s1375 = scalar_lea.vmem [#allocation10], %s1374
          %1376 = dma.done %s1372, 256
        $region76: #{tpu_custom_call.1} parent=71 // pred_fallthru
          _
      $region72: #{tpu_custom_call.1} parent=5 // pred_fallthru
        _
    $region6: #{tpu_custom_call.1} parent=1 // loop_footer
      %s25 = sadd.s32 1, %s21
    $region7: #{tpu_custom_call.1} parent=1 // loop_footer_branch
      %20 = sbr.rel target = $region3
    $region8: #{tpu_custom_call.1} parent=1 // loop_exit
      _
    %1377 = vsyncpa [#allocation3], 1
    %s1378 = scalar_lea.sflag [#allocation3], 1
    %1379 = vsyncpa %s1378, 1
    %1380 = vsyncpa [#allocation6], 1
    %1381 = vsyncpa [#allocation9], 1
    %1382 = vsyncpa [#allocation4], 1
    %s1383 = scalar_lea.sflag [#allocation4], 1
    %1384 = vsyncpa %s1383, 1

</llo_original>
